<compile_context>
chip_gen: v7x
topology: tpu7x:2x2x1
jax: 0.10.0
libtpu: 0.0.40
codegen_flags: <defaults>
</compile_context>

<pallas_src>
import functools

import jax
import jax.numpy as jnp
from jax import lax
from jax.experimental import pallas as pl
from jax.experimental.pallas import tpu as pltpu


def _gobal_attn_kernel(q_ref, k_ref, v_ref, o_ref, *, inv_scale, topk, search_dtype):
    # Blocks: q/o are (1, TQ, d); k/v are (1, d, N) (native layout, lane-dense).
    q = q_ref[0]
    q = q * jnp.asarray(inv_scale, q.dtype)      # pre-scale Q: TQ*d muls, not TQ*N
    k = k_ref[0]                                 # [d, N]
    v = v_ref[0]                                 # [d, N]

    # s = (q * (1/scale)) @ k  -- natural MXU orientation, no K relayout.
    # HIGHEST precision keeps f32 scores ~exact (the previous mismatch source).
    s = lax.dot_general(
        q, k,
        dimension_numbers=(((1,), (0,)), ((), ())),
        preferred_element_type=jnp.float32,
        precision=lax.Precision.HIGHEST,
    )                                            # [TQ, N] f32

    # ---- top-k threshold search: the VALU-binding loop --------------------
    # Iterative row-maxima over an immutable score tile; only the [TQ,1]
    # threshold is carried.  Runs in `search_dtype` (bf16 on v6e/v7x for 2x
    # packed VALU throughput, f32 elsewhere).  Casting is monotonic, so
    # cast(max(s)) == max(cast(s)) and the first iterate doubles as the
    # softmax max.
    row_max = jnp.max(s, axis=-1, keepdims=True)             # [TQ, 1] f32
    s_search = s.astype(search_dtype)
    neg_inf = jnp.asarray(-jnp.inf, search_dtype)
    kth = row_max.astype(search_dtype)
    for _ in range(topk - 1):
        kth = jnp.max(jnp.where(s_search < kth, s_search, neg_inf),
                      axis=-1, keepdims=True)

    # Masked softmax numerator (mask fused into the exp; weights stay f32).
    p = jnp.where(s_search >= kth, jnp.exp(s - row_max), 0.0)  # [TQ, N] f32
    denom = jnp.sum(p, axis=-1, keepdims=True)                 # [TQ, 1], >= 1

    # Weighted sum of the selected v rows == p @ v^T (A.B^T orientation, V
    # stays [d, N]); normalize AFTER the matmul so the scaling touches TQ*d
    # elements instead of TQ*N.  Exact reciprocal on the tiny [TQ,1] vector.
    out = lax.dot_general(
        p.astype(v.dtype), v,
        dimension_numbers=(((1,), (1,)), ((), ())),
        preferred_element_type=jnp.float32,
        precision=lax.Precision.HIGHEST,
    )                                            # [TQ, d] f32
    out = out * (1.0 / denom)
    o_ref[0] = out.astype(o_ref.dtype)


def _vmem_capacity_bytes():
    """Per-core VMEM capacity; conservative 64 MiB (v7x) if the query fails."""
    try:
        return int(pltpu.get_tpu_info().vmem_capacity_bytes)
    except Exception:
        return 64 * 1024 * 1024


def _default_search_dtype():
    """bf16 threshold search only on bf16-VALU parts (v6e/v7x); exact f32 else."""
    try:
        chip = str(pltpu.get_tpu_info().chip_version).lower()
    except Exception:
        return jnp.float32
    if ("v6" in chip) or ("v7" in chip) or ("7x" in chip):
        return jnp.bfloat16
    return jnp.float32


def _pick_block_q(n, vmem_budget_bytes, cap=1024):
    """Largest query tile that divides N, is a multiple of 8 (or == N), and keeps
    ~4 live f32 [TQ, N] score-tile intermediates inside the VMEM budget."""
    per_row_bytes = 4 * 4 * n
    limit = max(8, min(cap, vmem_budget_bytes // max(per_row_bytes, 1)))
    if n <= limit:
        return n
    bq = (limit // 8) * 8
    while bq >= 8:
        if n % bq == 0:
            return bq
        bq -= 8
    return n


def gobal_attention(q, k, v, *, head_dim, qk_scale=None, kernel_size=3,
                    block_q=None, search_dtype=None):
    B, d, H, W = q.shape
    assert d == head_dim
    N = H * W
    # Mirrors PyTorch `qk_scale or head_dim ** -0.5` (0.0 / None -> default),
    # which also avoids an infinite inv_scale.
    scale = qk_scale if qk_scale else head_dim ** (-0.5)
    inv_scale = 1.0 / scale
    K = kernel_size * kernel_size
    assert K <= N, "top-k size must not exceed number of tokens"

    if search_dtype is None:
        search_dtype = _default_search_dtype()

    # Generation-aware VMEM budget: ~96 MiB on 128-MiB parts (v5e/v6e),
    # ~48 MiB on 64-MiB parts (v7x) / unknown targets.
    vmem_cap = _vmem_capacity_bytes()
    vmem_limit = int(min(vmem_cap * 3 // 4, 112 * 1024 * 1024))

    tq = _pick_block_q(N, vmem_limit // 2) if block_q is None else block_q
    assert N % tq == 0, "query tile must divide N"
    assert tq % 8 == 0 or tq == N, "query tile must respect the (8,128) rule"

    # K and V stay in their native NCHW-collapsed [B, d, N] form: the reshape
    # is free (no HBM relayout before the custom call) and the [d, N] VMEM
    # blocks are lane-dense.  Only Q (and the output) are token-major [B, N, d].
    q2 = q.reshape(B, d, N).transpose(0, 2, 1)   # [B, N, d]
    k2 = k.reshape(B, d, N)                      # [B, d, N]
    v2 = v.reshape(B, d, N)                      # [B, d, N]

    kern = functools.partial(_gobal_attn_kernel, inv_scale=inv_scale, topk=K,
                             search_dtype=search_dtype)

    q_spec = pl.BlockSpec((1, tq, d), lambda b, i: (b, i, 0))
    # K/V index_maps ignore the q-tile axis: their block is fetched once per
    # batch element and revisited (no re-DMA) across all query tiles.
    kv_spec = pl.BlockSpec((1, d, N), lambda b, i: (b, 0, 0))
    o_spec = pl.BlockSpec((1, tq, d), lambda b, i: (b, i, 0))

    itemsize = jnp.dtype(q.dtype).itemsize
    cost = pl.CostEstimate(
        flops=4 * B * N * N * d,            # QK^T + P@V
        transcendentals=B * N * N,          # exp over the dense score tiles
        bytes_accessed=4 * B * N * d * itemsize,
    )

    out = pl.pallas_call(
        kern,
        out_shape=jax.ShapeDtypeStruct((B, N, d), q.dtype),
        grid_spec=pltpu.PrefetchScalarGridSpec(
            num_scalar_prefetch=0,
            grid=(B, N // tq),
            in_specs=[q_spec, kv_spec, kv_spec],
            out_specs=o_spec,
        ),
        compiler_params=pltpu.CompilerParams(
            dimension_semantics=("parallel", "parallel"),
            vmem_limit_bytes=vmem_limit,
        ),
        cost_estimate=cost,
    )(q2, k2, v2)

    return out.reshape(B, H, W, d)


def _reference(q, k, v, *, head_dim, qk_scale=None, kernel_size=3):
    """Pure-JAX replica of the PyTorch forward (top_k + gather), f32-exact."""
    B, d, H, W = q.shape
    N = H * W
    scale = qk_scale if qk_scale else head_dim ** (-0.5)
    q2 = q.reshape(B, d, N).transpose(0, 2, 1)
    k2 = k.reshape(B, d, N).transpose(0, 2, 1)
    v2 = v.reshape(B, d, N).transpose(0, 2, 1)
    attn = jnp.einsum("bnd,bmd->bnm", q2, k2,
                      precision=lax.Precision.HIGHEST) / scale
    vals, idx = lax.top_k(attn, kernel_size * kernel_size)
    p = jax.nn.softmax(vals, axis=-1)
    v_exp = jnp.broadcast_to(v2[:, None, :, :], (B, N, N, d))
    sel_v = jnp.take_along_axis(v_exp, idx[..., None], axis=2)
    x = jnp.sum(p[..., None] * sel_v, axis=2)    # exact f32 weighted sum
    return x.reshape(B, H, W, d)


if __name__ == "__main__":
    B, head_dim, H, W = 2, 32, 8, 8              # q/k/v: [B, head_dim, H, W]
    key = jax.random.PRNGKey(0)
    kq, kk, kv = jax.random.split(key, 3)
    q = jax.random.normal(kq, (B, head_dim, H, W), dtype=jnp.float32)
    k = jax.random.normal(kk, (B, head_dim, H, W), dtype=jnp.float32)
    v = jax.random.normal(kv, (B, head_dim, H, W), dtype=jnp.float32)

    ref = _reference(q, k, v, head_dim=head_dim, kernel_size=3)

    # Auto-tiled run (full-row query tile at this size).
    out = gobal_attention(q, k, v, head_dim=head_dim, kernel_size=3)
    out = jax.block_until_ready(out)
    assert out.shape == (B, H, W, head_dim)
    assert jnp.allclose(out, ref, atol=2e-3, rtol=2e-3), "mismatch vs reference (auto tile)"

    # Tiled run (block_q=32 -> 2 query tiles per batch; exercises K/V revisit).
    out_t = gobal_attention(q, k, v, head_dim=head_dim, kernel_size=3, block_q=32)
    out_t = jax.block_until_ready(out_t)
    assert jnp.allclose(out_t, ref, atol=2e-3, rtol=2e-3), "mismatch vs reference (tiled)"

    print("KERNEL_OK")
</pallas_src>

<mosaic_0001>
module attributes {stable_mosaic.version = 11 : i64} {
  func.func @_gobal_attn_kernel(%arg0: i32, %arg1: i32, %arg2: memref<1x64x32xf32, #tpu.memory_space<vmem>>, %arg3: memref<1x32x64xf32, #tpu.memory_space<vmem>>, %arg4: memref<1x32x64xf32, #tpu.memory_space<vmem>>, %arg5: memref<1x64x32xf32, #tpu.memory_space<vmem>>) attributes {dimension_semantics = [#tpu.dimension_semantics<parallel>, #tpu.dimension_semantics<parallel>], iteration_bounds = array<i64: 2, 1>, scalar_prefetch = 0 : i64, scratch_operands = 0 : i64, tpu.core_type = #tpu.core_type<tc>, window_params = [{transform_indices = @transform_0, window_bounds = array<i64: 1, 64, 32>}, {transform_indices = @transform_1, window_bounds = array<i64: 1, 32, 64>}, {transform_indices = @transform_2, window_bounds = array<i64: 1, 32, 64>}, {transform_indices = @transform_3, window_bounds = array<i64: 1, 64, 32>}]} {
    %c0 = arith.constant 0 : index
    %c0_0 = arith.constant 0 : index
    %c0_1 = arith.constant 0 : index
    %0 = vector.load %arg2[%c0, %c0_0, %c0_1] : memref<1x64x32xf32, #tpu.memory_space<vmem>>, vector<1x64x32xf32>
    %1 = vector.shape_cast %0 : vector<1x64x32xf32> to vector<64x32xf32>
    %cst = arith.constant 5.65685415 : f32
    %2 = vector.broadcast %cst : f32 to vector<64x32xf32>
    %3 = arith.mulf %1, %2 : vector<64x32xf32>
    %c0_2 = arith.constant 0 : index
    %c0_3 = arith.constant 0 : index
    %c0_4 = arith.constant 0 : index
    %4 = vector.load %arg3[%c0_2, %c0_3, %c0_4] : memref<1x32x64xf32, #tpu.memory_space<vmem>>, vector<1x32x64xf32>
    %5 = vector.shape_cast %4 : vector<1x32x64xf32> to vector<32x64xf32>
    %c0_5 = arith.constant 0 : index
    %c0_6 = arith.constant 0 : index
    %c0_7 = arith.constant 0 : index
    %6 = vector.load %arg4[%c0_5, %c0_6, %c0_7] : memref<1x32x64xf32, #tpu.memory_space<vmem>>, vector<1x32x64xf32>
    %7 = vector.shape_cast %6 : vector<1x32x64xf32> to vector<32x64xf32>
    %cst_8 = arith.constant dense<0.000000e+00> : vector<64x64xf32>
    %8 = tpu.matmul %3, %5, %cst_8 {dimension_numbers = #tpu.dot_dimension_numbers<[1], [0], [0], [1], [0, 0, 1, 1], [], []>, precision = #tpu.contract_precision<fp32>} : vector<64x32xf32>, vector<32x64xf32>, vector<64x64xf32> -> vector<64x64xf32>
    %cst_9 = arith.constant dense<0xFF800000> : vector<64xf32>
    %9 = vector.multi_reduction <maximumf>, %8, %cst_9 [1] : vector<64x64xf32> to vector<64xf32>
    %10 = vector.shape_cast %9 : vector<64xf32> to vector<64x1xf32>
    %11 = vector.broadcast %10 : vector<64x1xf32> to vector<64x64xf32>
    %12 = arith.cmpf olt, %8, %11 : vector<64x64xf32>
    %cst_10 = arith.constant 0xFF800000 : f32
    %13 = vector.broadcast %cst_10 : f32 to vector<64x64xf32>
    %14 = arith.select %12, %8, %13 : vector<64x64xi1>, vector<64x64xf32>
    %cst_11 = arith.constant dense<0xFF800000> : vector<64xf32>
    %15 = vector.multi_reduction <maximumf>, %14, %cst_11 [1] : vector<64x64xf32> to vector<64xf32>
    %16 = vector.shape_cast %15 : vector<64xf32> to vector<64x1xf32>
    %17 = vector.broadcast %16 : vector<64x1xf32> to vector<64x64xf32>
    %18 = arith.cmpf olt, %8, %17 : vector<64x64xf32>
    %cst_12 = arith.constant 0xFF800000 : f32
    %19 = vector.broadcast %cst_12 : f32 to vector<64x64xf32>
    %20 = arith.select %18, %8, %19 : vector<64x64xi1>, vector<64x64xf32>
    %cst_13 = arith.constant dense<0xFF800000> : vector<64xf32>
    %21 = vector.multi_reduction <maximumf>, %20, %cst_13 [1] : vector<64x64xf32> to vector<64xf32>
    %22 = vector.shape_cast %21 : vector<64xf32> to vector<64x1xf32>
    %23 = vector.broadcast %22 : vector<64x1xf32> to vector<64x64xf32>
    %24 = arith.cmpf olt, %8, %23 : vector<64x64xf32>
    %cst_14 = arith.constant 0xFF800000 : f32
    %25 = vector.broadcast %cst_14 : f32 to vector<64x64xf32>
    %26 = arith.select %24, %8, %25 : vector<64x64xi1>, vector<64x64xf32>
    %cst_15 = arith.constant dense<0xFF800000> : vector<64xf32>
    %27 = vector.multi_reduction <maximumf>, %26, %cst_15 [1] : vector<64x64xf32> to vector<64xf32>
    %28 = vector.shape_cast %27 : vector<64xf32> to vector<64x1xf32>
    %29 = vector.broadcast %28 : vector<64x1xf32> to vector<64x64xf32>
    %30 = arith.cmpf olt, %8, %29 : vector<64x64xf32>
    %cst_16 = arith.constant 0xFF800000 : f32
    %31 = vector.broadcast %cst_16 : f32 to vector<64x64xf32>
    %32 = arith.select %30, %8, %31 : vector<64x64xi1>, vector<64x64xf32>
    %cst_17 = arith.constant dense<0xFF800000> : vector<64xf32>
    %33 = vector.multi_reduction <maximumf>, %32, %cst_17 [1] : vector<64x64xf32> to vector<64xf32>
    %34 = vector.shape_cast %33 : vector<64xf32> to vector<64x1xf32>
    %35 = vector.broadcast %34 : vector<64x1xf32> to vector<64x64xf32>
    %36 = arith.cmpf olt, %8, %35 : vector<64x64xf32>
    %cst_18 = arith.constant 0xFF800000 : f32
    %37 = vector.broadcast %cst_18 : f32 to vector<64x64xf32>
    %38 = arith.select %36, %8, %37 : vector<64x64xi1>, vector<64x64xf32>
    %cst_19 = arith.constant dense<0xFF800000> : vector<64xf32>
    %39 = vector.multi_reduction <maximumf>, %38, %cst_19 [1] : vector<64x64xf32> to vector<64xf32>
    %40 = vector.shape_cast %39 : vector<64xf32> to vector<64x1xf32>
    %41 = vector.broadcast %40 : vector<64x1xf32> to vector<64x64xf32>
    %42 = arith.cmpf olt, %8, %41 : vector<64x64xf32>
    %cst_20 = arith.constant 0xFF800000 : f32
    %43 = vector.broadcast %cst_20 : f32 to vector<64x64xf32>
    %44 = arith.select %42, %8, %43 : vector<64x64xi1>, vector<64x64xf32>
    %cst_21 = arith.constant dense<0xFF800000> : vector<64xf32>
    %45 = vector.multi_reduction <maximumf>, %44, %cst_21 [1] : vector<64x64xf32> to vector<64xf32>
    %46 = vector.shape_cast %45 : vector<64xf32> to vector<64x1xf32>
    %47 = vector.broadcast %46 : vector<64x1xf32> to vector<64x64xf32>
    %48 = arith.cmpf olt, %8, %47 : vector<64x64xf32>
    %cst_22 = arith.constant 0xFF800000 : f32
    %49 = vector.broadcast %cst_22 : f32 to vector<64x64xf32>
    %50 = arith.select %48, %8, %49 : vector<64x64xi1>, vector<64x64xf32>
    %cst_23 = arith.constant dense<0xFF800000> : vector<64xf32>
    %51 = vector.multi_reduction <maximumf>, %50, %cst_23 [1] : vector<64x64xf32> to vector<64xf32>
    %52 = vector.shape_cast %51 : vector<64xf32> to vector<64x1xf32>
    %53 = vector.broadcast %52 : vector<64x1xf32> to vector<64x64xf32>
    %54 = arith.cmpf olt, %8, %53 : vector<64x64xf32>
    %cst_24 = arith.constant 0xFF800000 : f32
    %55 = vector.broadcast %cst_24 : f32 to vector<64x64xf32>
    %56 = arith.select %54, %8, %55 : vector<64x64xi1>, vector<64x64xf32>
    %cst_25 = arith.constant dense<0xFF800000> : vector<64xf32>
    %57 = vector.multi_reduction <maximumf>, %56, %cst_25 [1] : vector<64x64xf32> to vector<64xf32>
    %58 = vector.shape_cast %57 : vector<64xf32> to vector<64x1xf32>
    %59 = vector.broadcast %58 : vector<64x1xf32> to vector<64x64xf32>
    %60 = arith.cmpf oge, %8, %59 : vector<64x64xf32>
    %61 = vector.broadcast %10 : vector<64x1xf32> to vector<64x64xf32>
    %62 = arith.subf %8, %61 : vector<64x64xf32>
    %63 = math.exp %62 : vector<64x64xf32>
    %cst_26 = arith.constant 0.000000e+00 : f32
    %64 = vector.broadcast %cst_26 : f32 to vector<64x64xf32>
    %65 = arith.select %60, %63, %64 : vector<64x64xi1>, vector<64x64xf32>
    %cst_27 = arith.constant dense<0.000000e+00> : vector<64xf32>
    %66 = vector.multi_reduction <add>, %65, %cst_27 [1] : vector<64x64xf32> to vector<64xf32>
    %67 = vector.shape_cast %66 : vector<64xf32> to vector<64x1xf32>
    %cst_28 = arith.constant dense<0.000000e+00> : vector<64x32xf32>
    %68 = tpu.matmul %65, %7, %cst_28 {dimension_numbers = #tpu.dot_dimension_numbers<[1], [1], [0], [0], [0, 0, 1, 0], [], []>, precision = #tpu.contract_precision<fp32>} : vector<64x64xf32>, vector<32x64xf32>, vector<64x32xf32> -> vector<64x32xf32>
    %cst_29 = arith.constant 1.000000e+00 : f32
    %69 = vector.broadcast %cst_29 : f32 to vector<64x1xf32>
    %70 = arith.divf %69, %67 : vector<64x1xf32>
    %71 = vector.broadcast %70 : vector<64x1xf32> to vector<64x32xf32>
    %72 = arith.mulf %68, %71 : vector<64x32xf32>
    %c0_30 = arith.constant 0 : index
    %c0_31 = arith.constant 0 : index
    %c0_32 = arith.constant 0 : index
    %73 = vector.load %arg5[%c0_30, %c0_31, %c0_32] : memref<1x64x32xf32, #tpu.memory_space<vmem>>, vector<1x64x32xf32>
    %74 = vector.shape_cast %73 : vector<1x64x32xf32> to vector<64x32xf32>
    %75 = vector.shape_cast %72 : vector<64x32xf32> to vector<1x64x32xf32>
    tpu.vector_store %arg5[%c0_30, %c0_31, %c0_32], %75 {strides = array<i32>} : memref<1x64x32xf32, #tpu.memory_space<vmem>>, vector<1x64x32xf32>,
    return
  }
  func.func @transform_0(%arg0: i32, %arg1: i32) -> (i32, i32, i32) {
    %c0_i32 = arith.constant 0 : i32
    %c0_i32_0 = arith.constant 0 : i32
    return %arg0, %arg1, %c0_i32 : i32, i32, i32
  }
  func.func @transform_1(%arg0: i32, %arg1: i32) -> (i32, i32, i32) {
    %c0_i32 = arith.constant 0 : i32
    %c0_i32_0 = arith.constant 0 : i32
    %c0_i32_1 = arith.constant 0 : i32
    return %arg0, %c0_i32, %c0_i32_0 : i32, i32, i32
  }
  func.func @transform_2(%arg0: i32, %arg1: i32) -> (i32, i32, i32) {
    %c0_i32 = arith.constant 0 : i32
    %c0_i32_0 = arith.constant 0 : i32
    %c0_i32_1 = arith.constant 0 : i32
    return %arg0, %c0_i32, %c0_i32_0 : i32, i32, i32
  }
  func.func @transform_3(%arg0: i32, %arg1: i32) -> (i32, i32, i32) {
    %c0_i32 = arith.constant 0 : i32
    %c0_i32_0 = arith.constant 0 : i32
    return %arg0, %arg1, %c0_i32 : i32, i32, i32
  }
}

</mosaic_0001>

<llo_original>
// kernel: tpu_custom_call.1
$region0: #{tpu_custom_call.1}
  #allocation0 [shape = 'u32[]', space=smem, size = 0x4, offset = 0x4, fixed_abs, tag = 'smem constant byte address 0x4 - core index']
  #allocation1 [shape = 'u32[144,128]{1,0:T(1,128)}', space=vmem, size = 0x12000, scoped, tag = 'internal scratch']
  %s0 = inlined_call_operand.vmem [shape: f32[2,64,32], index: 0, kind: input, shape index: {}]
  %s1 = inlined_call_operand.vmem [shape: f32[2,32,64], index: 1, kind: input, shape index: {}]
  %s2 = inlined_call_operand.vmem [shape: f32[2,32,64], index: 2, kind: input, shape index: {}]
  %s3 = inlined_call_operand.vmem [shape: f32[2,64,32], index: 3, kind: output, shape index: {}]
  %s4 = sld [smem:[#allocation0]]
  $region45: #{tpu_custom_call.1} parent=0
    _
  %s6 = ssub.s32 1, %s4
  %s7 = scalar_select 0, %s6, %s4
  loop: start=0, step=1, limit=4
  $region2: #{tpu_custom_call.1} parent=0 // loop_pre_header
    _
  $region3: #{tpu_custom_call.1} parent=0 // loop_header
    %s9 = sphi 0, %s13
    %p10 = scmp.ge.s32.totalorder %s9, 4
    %s16 = sphi 0, %s28
    %s17 = sphi 0, %s24
    %s18 = sphi 0, %s16
    %s19 = sphi 0, %s17
    %s20 = sphi 0, %s18
    %s21 = sphi 0, %s19
    %s33 = sphi 0, %s35
    %s36 = sphi 0, %s33
    %s37 = sphi 0, %s36
    %s53 = sphi 0, %s37
    %s59 = sphi 0, %s61
    %s62 = sphi 0, %s59
    %s63 = sphi 0, %s62
    %s79 = sphi 0, %s63
    %s85 = sphi 0, %s87
    %s88 = sphi 0, %s85
    %s89 = sphi 0, %s88
    %s105 = sphi 0, %s89
    %s113 = sphi 0, %s115
    %s116 = sphi 0, %s113
    %s117 = sphi 0, %s116
    %s133 = sphi 0, %s117
  $region4: #{tpu_custom_call.1} parent=0 // loop_header_branch
    %12 = sbr.rel (%p10) target = $region8
  $region5: #{tpu_custom_call.1} parent=0 // loop_body
    %s14 = ssub.s32 %s9, 1
    %s15 = ssub.s32 %s9, 2
    %s22 = sadd.s32 1, %s17
    %p23 = scmp.ge.s32.totalorder %s22, 1
    %s24 = scalar_select %p23, 0, %s22
    %s25 = sadd.s32 1, %s16
    %s26 = scalar_select %p23, %s25, %s16
    %p27 = scmp.ge.s32.totalorder %s26, 2
    %s28 = scalar_select %p27, 0, %s26
    %s29 = ssub.s32 %s16, %s28
    %s30 = ssub.s32 %s17, %s24
    %s31 = sor.u32 %s29, %s30
    %p32 = scmp.eq.s32.totalorder %s31, 0
    %s34 = sadd.s32 %s33, 1
    %s35 = scalar_select %p32, %s33, %s34
    %p38 = pneg %p32
    %p39 = scmp.eq.s32.totalorder %s9, 1
    %p40 = por %p38, %p39
    %p41 = scmp.ne.s32.totalorder %s33, %s36
    %p42 = scmp.eq.s32.totalorder %s9, 0
    %p43 = por %p41, %p42
    %p44 = scmp.ne.s32.totalorder %s33, %s36
    %p45 = scmp.eq.s32.totalorder %s14, 1
    %p46 = por %p44, %p45
    %p47 = scmp.ne.s32.totalorder %s36, %s37
    %p48 = scmp.eq.s32.totalorder %s14, 0
    %p49 = por %p47, %p48
    %p50 = scmp.ne.s32.totalorder %s36, %s37
    %p51 = scmp.eq.s32.totalorder %s15, 1
    %p52 = por %p50, %p51
    %p54 = scmp.ne.s32.totalorder %s37, %s53
    %p55 = scmp.eq.s32.totalorder %s15, 0
    %p56 = por %p54, %p55
    %s57 = ssub.s32 %s16, %s28
    %p58 = scmp.eq.s32.totalorder %s57, 0
    %s60 = sadd.s32 %s59, 1
    %s61 = scalar_select %p58, %s59, %s60
    %p64 = pneg %p58
    %p65 = scmp.eq.s32.totalorder %s9, 1
    %p66 = por %p64, %p65
    %p67 = scmp.ne.s32.totalorder %s59, %s62
    %p68 = scmp.eq.s32.totalorder %s9, 0
    %p69 = por %p67, %p68
    %p70 = scmp.ne.s32.totalorder %s59, %s62
    %p71 = scmp.eq.s32.totalorder %s14, 1
    %p72 = por %p70, %p71
    %p73 = scmp.ne.s32.totalorder %s62, %s63
    %p74 = scmp.eq.s32.totalorder %s14, 0
    %p75 = por %p73, %p74
    %p76 = scmp.ne.s32.totalorder %s62, %s63
    %p77 = scmp.eq.s32.totalorder %s15, 1
    %p78 = por %p76, %p77
    %p80 = scmp.ne.s32.totalorder %s63, %s79
    %p81 = scmp.eq.s32.totalorder %s15, 0
    %p82 = por %p80, %p81
    %s83 = ssub.s32 %s16, %s28
    %p84 = scmp.eq.s32.totalorder %s83, 0
    %s86 = sadd.s32 %s85, 1
    %s87 = scalar_select %p84, %s85, %s86
    %p90 = pneg %p84
    %p91 = scmp.eq.s32.totalorder %s9, 1
    %p92 = por %p90, %p91
    %p93 = scmp.ne.s32.totalorder %s85, %s88
    %p94 = scmp.eq.s32.totalorder %s9, 0
    %p95 = por %p93, %p94
    %p96 = scmp.ne.s32.totalorder %s85, %s88
    %p97 = scmp.eq.s32.totalorder %s14, 1
    %p98 = por %p96, %p97
    %p99 = scmp.ne.s32.totalorder %s88, %s89
    %p100 = scmp.eq.s32.totalorder %s14, 0
    %p101 = por %p99, %p100
    %p102 = scmp.ne.s32.totalorder %s88, %s89
    %p103 = scmp.eq.s32.totalorder %s15, 1
    %p104 = por %p102, %p103
    %p106 = scmp.ne.s32.totalorder %s89, %s105
    %p107 = scmp.eq.s32.totalorder %s15, 0
    %p108 = por %p106, %p107
    %s109 = ssub.s32 %s16, %s28
    %s110 = ssub.s32 %s17, %s24
    %s111 = sor.u32 %s109, %s110
    %p112 = scmp.eq.s32.totalorder %s111, 0
    %s114 = sadd.s32 %s113, 1
    %s115 = scalar_select %p112, %s113, %s114
    %p118 = pneg %p112
    %p119 = scmp.eq.s32.totalorder %s9, 1
    %p120 = por %p118, %p119
    %p121 = scmp.ne.s32.totalorder %s113, %s116
    %p122 = scmp.eq.s32.totalorder %s9, 0
    %p123 = por %p121, %p122
    %p124 = scmp.ne.s32.totalorder %s113, %s116
    %p125 = scmp.eq.s32.totalorder %s14, 1
    %p126 = por %p124, %p125
    %p127 = scmp.ne.s32.totalorder %s116, %s117
    %p128 = scmp.eq.s32.totalorder %s14, 0
    %p129 = por %p127, %p128
    %p130 = scmp.ne.s32.totalorder %s116, %s117
    %p131 = scmp.eq.s32.totalorder %s15, 1
    %p132 = por %p130, %p131
    %p134 = scmp.ne.s32.totalorder %s117, %s133
    %p135 = scmp.eq.s32.totalorder %s15, 0
    %p136 = por %p134, %p135
    %p137 = scmp.le.s32.totalorder 1, %s9
    %p138 = scmp.lt.s32.totalorder %s9, 3
    %p139 = pnand %p137, %p138
    %p140 = pneg %p139
    // Predicated region
    $region9: #{tpu_custom_call.1} parent=5 // pred_check
      _
    $region10: #{tpu_custom_call.1} parent=5 // pred_check_branch
      %142 = sbr.rel (%p139) target = $region12
    $region11: #{tpu_custom_call.1} parent=5 // pred_region
      %s143 = ssub.s32 %s9, 1
    $region12: #{tpu_custom_call.1} parent=5 // pred_fallthru
      _
    %p144 = scmp.lt.s32.totalorder %s9, 2
    // Predicated region
    $region13: #{tpu_custom_call.1} parent=5 // pred_check
      %p145 = pneg %p144
    $region14: #{tpu_custom_call.1} parent=5 // pred_check_branch
      %147 = sbr.rel (%p145) target = $region16
    $region15: #{tpu_custom_call.1} parent=5 // pred_region
      // Predicated region
      $region17: #{tpu_custom_call.1} parent=15 // pred_check
        %p148 = pneg %p43
      $region18: #{tpu_custom_call.1} parent=15 // pred_check_branch
        %150 = sbr.rel (%p148) target = $region20
      $region19: #{tpu_custom_call.1} parent=15 // pred_region
        %s151 = smul.u32 8, %s17
        %p152 = scmp.lt.s32.totalorder %s16, 1
        %s153 = scalar_select %p152, %s16, 1
        %p154 = scmp.lt.s32.totalorder %s151, 7
        %s155 = scalar_select %p154, %s151, 7
        %s156 = smul.addr %s153, 8
        %s157 = sadd.s32 %s155, %s156
        %s158 = smul.addr %s157, 8
        %s159 = scalar_lea.vmem %s0, %s158
        %s160 = smul.u32 8, %s17
      $region20: #{tpu_custom_call.1} parent=15 // pred_fallthru
        _
      // Predicated region
      $region21: #{tpu_custom_call.1} parent=15 // pred_check
        %p161 = pneg %p69
      $region22: #{tpu_custom_call.1} parent=15 // pred_check_branch
        %163 = sbr.rel (%p161) target = $region24
      $region23: #{tpu_custom_call.1} parent=15 // pred_region
        %p164 = scmp.lt.s32.totalorder %s16, 1
        %s165 = scalar_select %p164, %s16, 1
        %s166 = smul.addr %s165, 4
        %s167 = smul.addr %s166, 8
        %s168 = scalar_lea.vmem %s1, %s167
      $region24: #{tpu_custom_call.1} parent=15 // pred_fallthru
        _
      // Predicated region
      $region25: #{tpu_custom_call.1} parent=15 // pred_check
        %p169 = pneg %p95
      $region26: #{tpu_custom_call.1} parent=15 // pred_check_branch
        %171 = sbr.rel (%p169) target = $region28
      $region27: #{tpu_custom_call.1} parent=15 // pred_region
        %p172 = scmp.lt.s32.totalorder %s16, 1
        %s173 = scalar_select %p172, %s16, 1
        %s174 = smul.addr %s173, 4
        %s175 = smul.addr %s174, 8
        %s176 = scalar_lea.vmem %s2, %s175
      $region28: #{tpu_custom_call.1} parent=15 // pred_fallthru
        _
    $region16: #{tpu_custom_call.1} parent=5 // pred_fallthru
      _
    %p177 = scmp.le.s32.totalorder 1, %s9
    %p178 = scmp.lt.s32.totalorder %s9, 3
    %p179 = pnand %p177, %p178
    %p180 = pneg %p179
    // Predicated region
    $region29: #{tpu_custom_call.1} parent=5 // pred_check
      _
    $region30: #{tpu_custom_call.1} parent=5 // pred_check_branch
      %182 = sbr.rel (%p179) target = $region32
    $region31: #{tpu_custom_call.1} parent=5 // pred_region
      %s183 = ssub.s32 %s9, 1
      %s184 = smul.u32 8, %s19
      %p185 = scmp.lt.s32.totalorder %s18, 1
      %s186 = scalar_select %p185, %s18, 1
      %p187 = scmp.lt.s32.totalorder %s184, 7
      %s188 = scalar_select %p187, %s184, 7
      %s189 = smul.addr %s186, 8
      %s190 = sadd.s32 %s188, %s189
      %s191 = smul.addr %s190, 8
      %s192 = scalar_lea.vmem %s0, %s191
      %p193 = pneg %p49
      %p194 = pneg %p46
      %p195 = scmp.lt.s32.totalorder %s18, 1
      %s196 = scalar_select %p195, %s18, 1
      %s197 = smul.addr %s196, 4
      %s198 = smul.addr %s197, 8
      %s199 = scalar_lea.vmem %s1, %s198
      %p200 = pneg %p75
      %p201 = pneg %p72
      %p202 = scmp.lt.s32.totalorder %s18, 1
      %s203 = scalar_select %p202, %s18, 1
      %s204 = smul.addr %s203, 4
      %s205 = smul.addr %s204, 8
      %s206 = scalar_lea.vmem %s2, %s205
      %p207 = pneg %p101
      %p208 = pneg %p98
      %p209 = pneg %p129
      %p210 = pneg %p126
      %s211 = smul.u32 8, %s19
      %p212 = scmp.lt.s32.totalorder %s18, 1
      %s213 = scalar_select %p212, %s18, 1
      %p214 = scmp.lt.s32.totalorder %s211, 7
      %s215 = scalar_select %p214, %s211, 7
      %s216 = smul.addr %s213, 8
      %s217 = sadd.s32 %s215, %s216
      %s218 = smul.addr %s217, 8
      %s219 = scalar_lea.vmem %s3, %s218
      %s220 = smul.u32 8, %s19
      %p221 = scmp.lt.s32.totalorder %s18, 1
      %s222 = scalar_select %p221, %s18, 1
      %p223 = scmp.lt.s32.totalorder %s220, 7
      %s224 = scalar_select %p223, %s220, 7
      %s225 = smul.addr %s222, 8
      %s226 = sadd.s32 %s224, %s225
      %s227 = smul.addr %s226, 8
      %s228 = scalar_lea.vmem %s0, %s227
      %s229 = smul.u32 8, %s19
      %p230 = scmp.lt.s32.totalorder %s18, 1
      %s231 = scalar_select %p230, %s18, 1
      %s232 = smul.addr %s231, 4
      %s233 = smul.addr %s232, 8
      %s234 = scalar_lea.vmem %s1, %s233
      %p235 = scmp.lt.s32.totalorder %s18, 1
      %s236 = scalar_select %p235, %s18, 1
      %s237 = smul.addr %s236, 4
      %s238 = smul.addr %s237, 8
      %s239 = scalar_lea.vmem %s2, %s238
      %s240 = smul.u32 8, %s19
      %p241 = scmp.lt.s32.totalorder %s18, 1
      %s242 = scalar_select %p241, %s18, 1
      %p243 = scmp.lt.s32.totalorder %s240, 7
      %s244 = scalar_select %p243, %s240, 7
      %s245 = smul.addr %s242, 8
      %s246 = sadd.s32 %s244, %s245
      %s247 = smul.addr %s246, 8
      %s248 = scalar_lea.vmem %s3, %s247
      %s249 = smul.u32 8, %s19
      %v250 = vld [vmem:[%s228] sm:$0xff]
      %v251 = vld [vmem:[%s228 + $0x8] sm:$0xff]
      %v252 = vld [vmem:[%s228 + $0x10] sm:$0xff]
      %v253 = vld [vmem:[%s228 + $0x18] sm:$0xff]
      %v254 = vld [vmem:[%s228 + $0x20] sm:$0xff]
      %v255 = vld [vmem:[%s228 + $0x28] sm:$0xff]
      %v256 = vld [vmem:[%s228 + $0x30] sm:$0xff]
      %v257 = vld [vmem:[%s228 + $0x38] sm:$0xff]
      %v258 = vmul.f32 %v250, 5.656854
      %v259 = vmul.f32 %v251, 5.656854
      %v260 = vmul.f32 %v252, 5.656854
      %v261 = vmul.f32 %v253, 5.656854
      %v262 = vmul.f32 %v254, 5.656854
      %v263 = vmul.f32 %v255, 5.656854
      %v264 = vmul.f32 %v256, 5.656854
      %v265 = vmul.f32 %v257, 5.656854
      %v266 = vld [vmem:[%s234] sm:$0xff]
      %v267 = vld [vmem:[%s234 + $0x8] sm:$0xff]
      %v268 = vld [vmem:[%s234 + $0x10] sm:$0xff]
      %v269 = vld [vmem:[%s234 + $0x18] sm:$0xff]
      %v270 = vld [vmem:[%s239] sm:$0xff]
      %v271 = vld [vmem:[%s239 + $0x8] sm:$0xff]
      %v272 = vld [vmem:[%s239 + $0x10] sm:$0xff]
      %v273 = vld [vmem:[%s239 + $0x18] sm:$0xff]
      %vm274 = vcmask 261120
      %v276 = vsel %vm274, %v258, 0
      %v279 = vsel %vm274, %v259, 0
      %v282 = vsel %vm274, %v260, 0
      %v285 = vsel %vm274, %v261, 0
      %v288 = vsel %vm274, %v262, 0
      %v291 = vsel %vm274, %v263, 0
      %v294 = vsel %vm274, %v264, 0
      %v297 = vsel %vm274, %v265, 0
      %299 = vmatprep.subr.mxu0 0.0
      %v300 = vand.u32 %v266, 4294901760
      %301 = vmatpush1.msra.mxu0 %v300
      %302 = vmatprep.subr.mxu0 0.0
      %v303 = vand.u32 %v267, 4294901760
      %304 = vmatpush1.msra.mxu0 %v303
      %305 = vmatprep.subr.mxu0 0.0
      %v306 = vand.u32 %v268, 4294901760
      %307 = vmatpush1.msra.mxu0 %v306
      %308 = vmatprep.subr.mxu0 0.0
      %v309 = vand.u32 %v269, 4294901760
      %310 = vmatpush1.msra.mxu0 %v309
      %311 = vmatprep.subr.mxu0 0.0
      %312 = vmatpush1.msra.mxu0 0.0
      %313 = vmatprep.subr.mxu0 0.0
      %314 = vmatpush1.msra.mxu0 0.0
      %315 = vmatprep.subr.mxu0 0.0
      %316 = vmatpush1.msra.mxu0 0.0
      %317 = vmatprep.subr.mxu0 0.0
      %318 = vmatpush1.msra.mxu0 0.0
      %319 = vmatprep.subr.mxu0 0.0
      %320 = vmatpush1.msra.mxu0 0.0
      %321 = vmatprep.subr.mxu0 0.0
      %322 = vmatpush1.msra.mxu0 0.0
      %323 = vmatprep.subr.mxu0 0.0
      %324 = vmatpush1.msra.mxu0 0.0
      %325 = vmatprep.subr.mxu0 0.0
      %326 = vmatpush1.msra.mxu0 0.0
      %327 = vmatprep.subr.mxu0 0.0
      %328 = vmatpush1.msra.mxu0 0.0
      %329 = vmatprep.subr.mxu0 0.0
      %330 = vmatpush1.msra.mxu0 0.0
      %331 = vmatprep.subr.mxu0 0.0
      %332 = vmatpush1.msra.mxu0 0.0
      %333 = vmatprep.subr.mxu0 0.0
      %334 = vmatpush1.msra.mxu0 0.0
      %335 = vmatprep.subr.mxu0 0.0
      %336 = vmatpush1.msra.mxu0 0.0
      %337 = vmatprep.subr.mxu0 0.0
      %338 = vmatpush1.msra.mxu0 0.0
      %339 = vmatprep.subr.mxu0 0.0
      %340 = vmatpush1.msra.mxu0 0.0
      %341 = vmatprep.subr.mxu0 0.0
      %342 = vmatpush1.msra.mxu0 0.0
      %343 = vmatprep.subr.mxu0 0.0
      %344 = vmatpush1.msra.mxu0 0.0
      %345 = vmatprep.subr.mxu0 0.0
      %346 = vmatpush1.msra.mxu0 0.0
      %347 = vmatprep.subr.mxu0 0.0
      %348 = vmatpush1.msra.mxu0 0.0
      %349 = vmatprep.subr.mxu0 0.0
      %350 = vmatpush1.msra.mxu0 0.0
      %351 = vmatprep.subr.mxu0 0.0
      %352 = vmatpush1.msra.mxu0 0.0
      %353 = vmatprep.subr.mxu0 0.0
      %354 = vmatpush1.msra.mxu0 0.0
      %355 = vmatprep.subr.mxu0 0.0
      %356 = vmatpush1.msra.mxu0 0.0
      %357 = vmatprep.subr.mxu0 0.0
      %358 = vmatpush1.msra.mxu0 0.0
      %359 = vmatprep.subr.mxu0 0.0
      %360 = vmatpush1.msra.mxu0 0.0
      %361 = vmatprep.subr.mxu0 0.0
      %362 = vmatpush1.msra.mxu0 0.0
      %363 = vmatprep.subr.mxu0 0.0
      %364 = vmatpush1.msra.mxu0 0.0
      %365 = vmatprep.subr.mxu0 0.0
      %366 = vmatpush1.msra.mxu0 0.0
      %367 = vmatprep.mubr.f32.mxu0 0.0
      %v368 = vand.u32 %v276, 4294901760
      %v369 = vsub.f32 %v276, %v368
      %v370 = vand.u32 %v369, 4294901760
      %v371 = vsub.f32 %v369, %v370
      %v372 = vand.u32 %v371, 4294901760
      %373 = vmatmul.mubr.f32.gmra.mrb[0].mxu0 %v372
      %v374 = vpop.f32.mrb[0].mxu0
      %v375 = vadd.f32 0.0, %v374
      %v376 = vpop.f32.mrb[0].mxu0
      %377 = vmatprep.mubr.f32.mxu0 0.0
      %v378 = vand.u32 %v279, 4294901760
      %v379 = vsub.f32 %v279, %v378
      %v380 = vand.u32 %v379, 4294901760
      %v381 = vsub.f32 %v379, %v380
      %v382 = vand.u32 %v381, 4294901760
      %383 = vmatmul.mubr.f32.gmra.mrb[0].mxu0 %v382
      %v384 = vpop.f32.mrb[0].mxu0
      %v385 = vadd.f32 0.0, %v384
      %v386 = vpop.f32.mrb[0].mxu0
      %387 = vmatprep.mubr.f32.mxu0 0.0
      %v388 = vand.u32 %v282, 4294901760
      %v389 = vsub.f32 %v282, %v388
      %v390 = vand.u32 %v389, 4294901760
      %v391 = vsub.f32 %v389, %v390
      %v392 = vand.u32 %v391, 4294901760
      %393 = vmatmul.mubr.f32.gmra.mrb[0].mxu0 %v392
      %v394 = vpop.f32.mrb[0].mxu0
      %v395 = vadd.f32 0.0, %v394
      %v396 = vpop.f32.mrb[0].mxu0
      %397 = vmatprep.mubr.f32.mxu0 0.0
      %v398 = vand.u32 %v285, 4294901760
      %v399 = vsub.f32 %v285, %v398
      %v400 = vand.u32 %v399, 4294901760
      %v401 = vsub.f32 %v399, %v400
      %v402 = vand.u32 %v401, 4294901760
      %403 = vmatmul.mubr.f32.gmra.mrb[0].mxu0 %v402
      %v404 = vpop.f32.mrb[0].mxu0
      %v405 = vadd.f32 0.0, %v404
      %v406 = vpop.f32.mrb[0].mxu0
      %407 = vmatprep.mubr.f32.mxu0 0.0
      %v408 = vand.u32 %v288, 4294901760
      %v409 = vsub.f32 %v288, %v408
      %v410 = vand.u32 %v409, 4294901760
      %v411 = vsub.f32 %v409, %v410
      %v412 = vand.u32 %v411, 4294901760
      %413 = vmatmul.mubr.f32.gmra.mrb[0].mxu0 %v412
      %v414 = vpop.f32.mrb[0].mxu0
      %v415 = vadd.f32 0.0, %v414
      %v416 = vpop.f32.mrb[0].mxu0
      %417 = vmatprep.mubr.f32.mxu0 0.0
      %v418 = vand.u32 %v291, 4294901760
      %v419 = vsub.f32 %v291, %v418
      %v420 = vand.u32 %v419, 4294901760
      %v421 = vsub.f32 %v419, %v420
      %v422 = vand.u32 %v421, 4294901760
      %423 = vmatmul.mubr.f32.gmra.mrb[0].mxu0 %v422
      %v424 = vpop.f32.mrb[0].mxu0
      %v425 = vadd.f32 0.0, %v424
      %v426 = vpop.f32.mrb[0].mxu0
      %427 = vmatprep.mubr.f32.mxu0 0.0
      %v428 = vand.u32 %v294, 4294901760
      %v429 = vsub.f32 %v294, %v428
      %v430 = vand.u32 %v429, 4294901760
      %v431 = vsub.f32 %v429, %v430
      %v432 = vand.u32 %v431, 4294901760
      %433 = vmatmul.mubr.f32.gmra.mrb[0].mxu0 %v432
      %v434 = vpop.f32.mrb[0].mxu0
      %v435 = vadd.f32 0.0, %v434
      %v436 = vpop.f32.mrb[0].mxu0
      %437 = vmatprep.mubr.f32.mxu0 0.0
      %v438 = vand.u32 %v297, 4294901760
      %v439 = vsub.f32 %v297, %v438
      %v440 = vand.u32 %v439, 4294901760
      %v441 = vsub.f32 %v439, %v440
      %v442 = vand.u32 %v441, 4294901760
      %443 = vmatmul.mubr.f32.gmra.mrb[0].mxu0 %v442
      %v444 = vpop.f32.mrb[0].mxu0
      %v445 = vadd.f32 0.0, %v444
      %v446 = vpop.f32.mrb[0].mxu0
      %447 = vdwg.mxu0
      %448 = vmatprep.subr.mxu0 0.0
      %v449 = vand.u32 %v266, 4294901760
      %v450 = vsub.f32 %v266, %v449
      %v451 = vand.u32 %v450, 4294901760
      %v452 = vsub.f32 %v450, %v451
      %v453 = vand.u32 %v452, 4294901760
      %454 = vmatpush1.msra.mxu0 %v453
      %455 = vmatprep.subr.mxu0 0.0
      %v456 = vand.u32 %v267, 4294901760
      %v457 = vsub.f32 %v267, %v456
      %v458 = vand.u32 %v457, 4294901760
      %v459 = vsub.f32 %v457, %v458
      %v460 = vand.u32 %v459, 4294901760
      %461 = vmatpush1.msra.mxu0 %v460
      %462 = vmatprep.subr.mxu0 0.0
      %v463 = vand.u32 %v268, 4294901760
      %v464 = vsub.f32 %v268, %v463
      %v465 = vand.u32 %v464, 4294901760
      %v466 = vsub.f32 %v464, %v465
      %v467 = vand.u32 %v466, 4294901760
      %468 = vmatpush1.msra.mxu0 %v467
      %469 = vmatprep.subr.mxu0 0.0
      %v470 = vand.u32 %v269, 4294901760
      %v471 = vsub.f32 %v269, %v470
      %v472 = vand.u32 %v471, 4294901760
      %v473 = vsub.f32 %v471, %v472
      %v474 = vand.u32 %v473, 4294901760
      %475 = vmatpush1.msra.mxu0 %v474
      %476 = vmatprep.subr.mxu0 0.0
      %477 = vmatpush1.msra.mxu0 0.0
      %478 = vmatprep.subr.mxu0 0.0
      %479 = vmatpush1.msra.mxu0 0.0
      %480 = vmatprep.subr.mxu0 0.0
      %481 = vmatpush1.msra.mxu0 0.0
      %482 = vmatprep.subr.mxu0 0.0
      %483 = vmatpush1.msra.mxu0 0.0
      %484 = vmatprep.subr.mxu0 0.0
      %485 = vmatpush1.msra.mxu0 0.0
      %486 = vmatprep.subr.mxu0 0.0
      %487 = vmatpush1.msra.mxu0 0.0
      %488 = vmatprep.subr.mxu0 0.0
      %489 = vmatpush1.msra.mxu0 0.0
      %490 = vmatprep.subr.mxu0 0.0
      %491 = vmatpush1.msra.mxu0 0.0
      %492 = vmatprep.subr.mxu0 0.0
      %493 = vmatpush1.msra.mxu0 0.0
      %494 = vmatprep.subr.mxu0 0.0
      %495 = vmatpush1.msra.mxu0 0.0
      %496 = vmatprep.subr.mxu0 0.0
      %497 = vmatpush1.msra.mxu0 0.0
      %498 = vmatprep.subr.mxu0 0.0
      %499 = vmatpush1.msra.mxu0 0.0
      %500 = vmatprep.subr.mxu0 0.0
      %501 = vmatpush1.msra.mxu0 0.0
      %502 = vmatprep.subr.mxu0 0.0
      %503 = vmatpush1.msra.mxu0 0.0
      %504 = vmatprep.subr.mxu0 0.0
      %505 = vmatpush1.msra.mxu0 0.0
      %506 = vmatprep.subr.mxu0 0.0
      %507 = vmatpush1.msra.mxu0 0.0
      %508 = vmatprep.subr.mxu0 0.0
      %509 = vmatpush1.msra.mxu0 0.0
      %510 = vmatprep.subr.mxu0 0.0
      %511 = vmatpush1.msra.mxu0 0.0
      %512 = vmatprep.subr.mxu0 0.0
      %513 = vmatpush1.msra.mxu0 0.0
      %514 = vmatprep.subr.mxu0 0.0
      %515 = vmatpush1.msra.mxu0 0.0
      %516 = vmatprep.subr.mxu0 0.0
      %517 = vmatpush1.msra.mxu0 0.0
      %518 = vmatprep.subr.mxu0 0.0
      %519 = vmatpush1.msra.mxu0 0.0
      %520 = vmatprep.subr.mxu0 0.0
      %521 = vmatpush1.msra.mxu0 0.0
      %522 = vmatprep.subr.mxu0 0.0
      %523 = vmatpush1.msra.mxu0 0.0
      %524 = vmatprep.subr.mxu0 0.0
      %525 = vmatpush1.msra.mxu0 0.0
      %526 = vmatprep.subr.mxu0 0.0
      %527 = vmatpush1.msra.mxu0 0.0
      %528 = vmatprep.subr.mxu0 0.0
      %529 = vmatpush1.msra.mxu0 0.0
      %530 = vmatprep.subr.mxu0 0.0
      %531 = vmatpush1.msra.mxu0 0.0
      %532 = vmatprep.mubr.f32.mxu0 0.0
      %v533 = vand.u32 %v276, 4294901760
      %534 = vmatmul.mubr.f32.gmra.mrb[0].mxu0 %v533
      %v535 = vpop.f32.mrb[0].mxu0
      %v536 = vadd.f32 %v375, %v535
      %v537 = vpop.f32.mrb[0].mxu0
      %538 = vmatprep.mubr.f32.mxu0 0.0
      %v539 = vand.u32 %v279, 4294901760
      %540 = vmatmul.mubr.f32.gmra.mrb[0].mxu0 %v539
      %v541 = vpop.f32.mrb[0].mxu0
      %v542 = vadd.f32 %v385, %v541
      %v543 = vpop.f32.mrb[0].mxu0
      %544 = vmatprep.mubr.f32.mxu0 0.0
      %v545 = vand.u32 %v282, 4294901760
      %546 = vmatmul.mubr.f32.gmra.mrb[0].mxu0 %v545
      %v547 = vpop.f32.mrb[0].mxu0
      %v548 = vadd.f32 %v395, %v547
      %v549 = vpop.f32.mrb[0].mxu0
      %550 = vmatprep.mubr.f32.mxu0 0.0
      %v551 = vand.u32 %v285, 4294901760
      %552 = vmatmul.mubr.f32.gmra.mrb[0].mxu0 %v551
      %v553 = vpop.f32.mrb[0].mxu0
      %v554 = vadd.f32 %v405, %v553
      %v555 = vpop.f32.mrb[0].mxu0
      %556 = vmatprep.mubr.f32.mxu0 0.0
      %v557 = vand.u32 %v288, 4294901760
      %558 = vmatmul.mubr.f32.gmra.mrb[0].mxu0 %v557
      %v559 = vpop.f32.mrb[0].mxu0
      %v560 = vadd.f32 %v415, %v559
      %v561 = vpop.f32.mrb[0].mxu0
      %562 = vmatprep.mubr.f32.mxu0 0.0
      %v563 = vand.u32 %v291, 4294901760
      %564 = vmatmul.mubr.f32.gmra.mrb[0].mxu0 %v563
      %v565 = vpop.f32.mrb[0].mxu0
      %v566 = vadd.f32 %v425, %v565
      %v567 = vpop.f32.mrb[0].mxu0
      %568 = vmatprep.mubr.f32.mxu0 0.0
      %v569 = vand.u32 %v294, 4294901760
      %570 = vmatmul.mubr.f32.gmra.mrb[0].mxu0 %v569
      %v571 = vpop.f32.mrb[0].mxu0
      %v572 = vadd.f32 %v435, %v571
      %v573 = vpop.f32.mrb[0].mxu0
      %574 = vmatprep.mubr.f32.mxu0 0.0
      %v575 = vand.u32 %v297, 4294901760
      %576 = vmatmul.mubr.f32.gmra.mrb[0].mxu0 %v575
      %v577 = vpop.f32.mrb[0].mxu0
      %v578 = vadd.f32 %v445, %v577
      %v579 = vpop.f32.mrb[0].mxu0
      %580 = vdwg.mxu0
      %581 = vmatprep.subr.mxu0 0.0
      %v582 = vand.u32 %v266, 4294901760
      %v583 = vsub.f32 %v266, %v582
      %584 = vmatpush1.msra.mxu0 %v583
      %585 = vmatprep.subr.mxu0 0.0
      %v586 = vand.u32 %v267, 4294901760
      %v587 = vsub.f32 %v267, %v586
      %588 = vmatpush1.msra.mxu0 %v587
      %589 = vmatprep.subr.mxu0 0.0
      %v590 = vand.u32 %v268, 4294901760
      %v591 = vsub.f32 %v268, %v590
      %592 = vmatpush1.msra.mxu0 %v591
      %593 = vmatprep.subr.mxu0 0.0
      %v594 = vand.u32 %v269, 4294901760
      %v595 = vsub.f32 %v269, %v594
      %596 = vmatpush1.msra.mxu0 %v595
      %597 = vmatprep.subr.mxu0 0.0
      %598 = vmatpush1.msra.mxu0 0.0
      %599 = vmatprep.subr.mxu0 0.0
      %600 = vmatpush1.msra.mxu0 0.0
      %601 = vmatprep.subr.mxu0 0.0
      %602 = vmatpush1.msra.mxu0 0.0
      %603 = vmatprep.subr.mxu0 0.0
      %604 = vmatpush1.msra.mxu0 0.0
      %605 = vmatprep.subr.mxu0 0.0
      %606 = vmatpush1.msra.mxu0 0.0
      %607 = vmatprep.subr.mxu0 0.0
      %608 = vmatpush1.msra.mxu0 0.0
      %609 = vmatprep.subr.mxu0 0.0
      %610 = vmatpush1.msra.mxu0 0.0
      %611 = vmatprep.subr.mxu0 0.0
      %612 = vmatpush1.msra.mxu0 0.0
      %613 = vmatprep.subr.mxu0 0.0
      %614 = vmatpush1.msra.mxu0 0.0
      %615 = vmatprep.subr.mxu0 0.0
      %616 = vmatpush1.msra.mxu0 0.0
      %617 = vmatprep.subr.mxu0 0.0
      %618 = vmatpush1.msra.mxu0 0.0
      %619 = vmatprep.subr.mxu0 0.0
      %620 = vmatpush1.msra.mxu0 0.0
      %621 = vmatprep.subr.mxu0 0.0
      %622 = vmatpush1.msra.mxu0 0.0
      %623 = vmatprep.subr.mxu0 0.0
      %624 = vmatpush1.msra.mxu0 0.0
      %625 = vmatprep.subr.mxu0 0.0
      %626 = vmatpush1.msra.mxu0 0.0
      %627 = vmatprep.subr.mxu0 0.0
      %628 = vmatpush1.msra.mxu0 0.0
      %629 = vmatprep.subr.mxu0 0.0
      %630 = vmatpush1.msra.mxu0 0.0
      %631 = vmatprep.subr.mxu0 0.0
      %632 = vmatpush1.msra.mxu0 0.0
      %633 = vmatprep.subr.mxu0 0.0
      %634 = vmatpush1.msra.mxu0 0.0
      %635 = vmatprep.subr.mxu0 0.0
      %636 = vmatpush1.msra.mxu0 0.0
      %637 = vmatprep.subr.mxu0 0.0
      %638 = vmatpush1.msra.mxu0 0.0
      %639 = vmatprep.subr.mxu0 0.0
      %640 = vmatpush1.msra.mxu0 0.0
      %641 = vmatprep.subr.mxu0 0.0
      %642 = vmatpush1.msra.mxu0 0.0
      %643 = vmatprep.subr.mxu0 0.0
      %644 = vmatpush1.msra.mxu0 0.0
      %645 = vmatprep.subr.mxu0 0.0
      %646 = vmatpush1.msra.mxu0 0.0
      %647 = vmatprep.subr.mxu0 0.0
      %648 = vmatpush1.msra.mxu0 0.0
      %649 = vmatprep.subr.mxu0 0.0
      %650 = vmatpush1.msra.mxu0 0.0
      %651 = vmatprep.subr.mxu0 0.0
      %652 = vmatpush1.msra.mxu0 0.0
      %653 = vmatprep.mubr.f32.mxu0 0.0
      %v654 = vand.u32 %v276, 4294901760
      %v655 = vsub.f32 %v276, %v654
      %656 = vmatmul.mubr.f32.gmra.mrb[0].mxu0 %v655
      %v657 = vpop.f32.mrb[0].mxu0
      %v658 = vadd.f32 %v536, %v657
      %v659 = vpop.f32.mrb[0].mxu0
      %660 = vmatprep.mubr.f32.mxu0 0.0
      %v661 = vand.u32 %v279, 4294901760
      %v662 = vsub.f32 %v279, %v661
      %663 = vmatmul.mubr.f32.gmra.mrb[0].mxu0 %v662
      %v664 = vpop.f32.mrb[0].mxu0
      %v665 = vadd.f32 %v542, %v664
      %v666 = vpop.f32.mrb[0].mxu0
      %667 = vmatprep.mubr.f32.mxu0 0.0
      %v668 = vand.u32 %v282, 4294901760
      %v669 = vsub.f32 %v282, %v668
      %670 = vmatmul.mubr.f32.gmra.mrb[0].mxu0 %v669
      %v671 = vpop.f32.mrb[0].mxu0
      %v672 = vadd.f32 %v548, %v671
      %v673 = vpop.f32.mrb[0].mxu0
      %674 = vmatprep.mubr.f32.mxu0 0.0
      %v675 = vand.u32 %v285, 4294901760
      %v676 = vsub.f32 %v285, %v675
      %677 = vmatmul.mubr.f32.gmra.mrb[0].mxu0 %v676
      %v678 = vpop.f32.mrb[0].mxu0
      %v679 = vadd.f32 %v554, %v678
      %v680 = vpop.f32.mrb[0].mxu0
      %681 = vmatprep.mubr.f32.mxu0 0.0
      %v682 = vand.u32 %v288, 4294901760
      %v683 = vsub.f32 %v288, %v682
      %684 = vmatmul.mubr.f32.gmra.mrb[0].mxu0 %v683
      %v685 = vpop.f32.mrb[0].mxu0
      %v686 = vadd.f32 %v560, %v685
      %v687 = vpop.f32.mrb[0].mxu0
      %688 = vmatprep.mubr.f32.mxu0 0.0
      %v689 = vand.u32 %v291, 4294901760
      %v690 = vsub.f32 %v291, %v689
      %691 = vmatmul.mubr.f32.gmra.mrb[0].mxu0 %v690
      %v692 = vpop.f32.mrb[0].mxu0
      %v693 = vadd.f32 %v566, %v692
      %v694 = vpop.f32.mrb[0].mxu0
      %695 = vmatprep.mubr.f32.mxu0 0.0
      %v696 = vand.u32 %v294, 4294901760
      %v697 = vsub.f32 %v294, %v696
      %698 = vmatmul.mubr.f32.gmra.mrb[0].mxu0 %v697
      %v699 = vpop.f32.mrb[0].mxu0
      %v700 = vadd.f32 %v572, %v699
      %v701 = vpop.f32.mrb[0].mxu0
      %702 = vmatprep.mubr.f32.mxu0 0.0
      %v703 = vand.u32 %v297, 4294901760
      %v704 = vsub.f32 %v297, %v703
      %705 = vmatmul.mubr.f32.gmra.mrb[0].mxu0 %v704
      %v706 = vpop.f32.mrb[0].mxu0
      %v707 = vadd.f32 %v578, %v706
      %v708 = vpop.f32.mrb[0].mxu0
      %709 = vdwg.mxu0
      %710 = vmatprep.subr.mxu0 0.0
      %v711 = vand.u32 %v266, 4294901760
      %712 = vmatpush1.msra.mxu0 %v711
      %713 = vmatprep.subr.mxu0 0.0
      %v714 = vand.u32 %v267, 4294901760
      %715 = vmatpush1.msra.mxu0 %v714
      %716 = vmatprep.subr.mxu0 0.0
      %v717 = vand.u32 %v268, 4294901760
      %718 = vmatpush1.msra.mxu0 %v717
      %719 = vmatprep.subr.mxu0 0.0
      %v720 = vand.u32 %v269, 4294901760
      %721 = vmatpush1.msra.mxu0 %v720
      %722 = vmatprep.subr.mxu0 0.0
      %723 = vmatpush1.msra.mxu0 0.0
      %724 = vmatprep.subr.mxu0 0.0
      %725 = vmatpush1.msra.mxu0 0.0
      %726 = vmatprep.subr.mxu0 0.0
      %727 = vmatpush1.msra.mxu0 0.0
      %728 = vmatprep.subr.mxu0 0.0
      %729 = vmatpush1.msra.mxu0 0.0
      %730 = vmatprep.subr.mxu0 0.0
      %731 = vmatpush1.msra.mxu0 0.0
      %732 = vmatprep.subr.mxu0 0.0
      %733 = vmatpush1.msra.mxu0 0.0
      %734 = vmatprep.subr.mxu0 0.0
      %735 = vmatpush1.msra.mxu0 0.0
      %736 = vmatprep.subr.mxu0 0.0
      %737 = vmatpush1.msra.mxu0 0.0
      %738 = vmatprep.subr.mxu0 0.0
      %739 = vmatpush1.msra.mxu0 0.0
      %740 = vmatprep.subr.mxu0 0.0
      %741 = vmatpush1.msra.mxu0 0.0
      %742 = vmatprep.subr.mxu0 0.0
      %743 = vmatpush1.msra.mxu0 0.0
      %744 = vmatprep.subr.mxu0 0.0
      %745 = vmatpush1.msra.mxu0 0.0
      %746 = vmatprep.subr.mxu0 0.0
      %747 = vmatpush1.msra.mxu0 0.0
      %748 = vmatprep.subr.mxu0 0.0
      %749 = vmatpush1.msra.mxu0 0.0
      %750 = vmatprep.subr.mxu0 0.0
      %751 = vmatpush1.msra.mxu0 0.0
      %752 = vmatprep.subr.mxu0 0.0
      %753 = vmatpush1.msra.mxu0 0.0
      %754 = vmatprep.subr.mxu0 0.0
      %755 = vmatpush1.msra.mxu0 0.0
      %756 = vmatprep.subr.mxu0 0.0
      %757 = vmatpush1.msra.mxu0 0.0
      %758 = vmatprep.subr.mxu0 0.0
      %759 = vmatpush1.msra.mxu0 0.0
      %760 = vmatprep.subr.mxu0 0.0
      %761 = vmatpush1.msra.mxu0 0.0
      %762 = vmatprep.subr.mxu0 0.0
      %763 = vmatpush1.msra.mxu0 0.0
      %764 = vmatprep.subr.mxu0 0.0
      %765 = vmatpush1.msra.mxu0 0.0
      %766 = vmatprep.subr.mxu0 0.0
      %767 = vmatpush1.msra.mxu0 0.0
      %768 = vmatprep.subr.mxu0 0.0
      %769 = vmatpush1.msra.mxu0 0.0
      %770 = vmatprep.subr.mxu0 0.0
      %771 = vmatpush1.msra.mxu0 0.0
      %772 = vmatprep.subr.mxu0 0.0
      %773 = vmatpush1.msra.mxu0 0.0
      %774 = vmatprep.subr.mxu0 0.0
      %775 = vmatpush1.msra.mxu0 0.0
      %776 = vmatprep.subr.mxu0 0.0
      %777 = vmatpush1.msra.mxu0 0.0
      %778 = vmatprep.mubr.f32.mxu0 0.0
      %v779 = vand.u32 %v276, 4294901760
      %v780 = vsub.f32 %v276, %v779
      %v781 = vand.u32 %v780, 4294901760
      %782 = vmatmul.mubr.f32.gmra.mrb[0].mxu0 %v781
      %v783 = vpop.f32.mrb[0].mxu0
      %v784 = vadd.f32 %v658, %v783
      %v785 = vpop.f32.mrb[0].mxu0
      %786 = vmatprep.mubr.f32.mxu0 0.0
      %v787 = vand.u32 %v279, 4294901760
      %v788 = vsub.f32 %v279, %v787
      %v789 = vand.u32 %v788, 4294901760
      %790 = vmatmul.mubr.f32.gmra.mrb[0].mxu0 %v789
      %v791 = vpop.f32.mrb[0].mxu0
      %v792 = vadd.f32 %v665, %v791
      %v793 = vpop.f32.mrb[0].mxu0
      %794 = vmatprep.mubr.f32.mxu0 0.0
      %v795 = vand.u32 %v282, 4294901760
      %v796 = vsub.f32 %v282, %v795
      %v797 = vand.u32 %v796, 4294901760
      %798 = vmatmul.mubr.f32.gmra.mrb[0].mxu0 %v797
      %v799 = vpop.f32.mrb[0].mxu0
      %v800 = vadd.f32 %v672, %v799
      %v801 = vpop.f32.mrb[0].mxu0
      %802 = vmatprep.mubr.f32.mxu0 0.0
      %v803 = vand.u32 %v285, 4294901760
      %v804 = vsub.f32 %v285, %v803
      %v805 = vand.u32 %v804, 4294901760
      %806 = vmatmul.mubr.f32.gmra.mrb[0].mxu0 %v805
      %v807 = vpop.f32.mrb[0].mxu0
      %v808 = vadd.f32 %v679, %v807
      %v809 = vpop.f32.mrb[0].mxu0
      %810 = vmatprep.mubr.f32.mxu0 0.0
      %v811 = vand.u32 %v288, 4294901760
      %v812 = vsub.f32 %v288, %v811
      %v813 = vand.u32 %v812, 4294901760
      %814 = vmatmul.mubr.f32.gmra.mrb[0].mxu0 %v813
      %v815 = vpop.f32.mrb[0].mxu0
      %v816 = vadd.f32 %v686, %v815
      %v817 = vpop.f32.mrb[0].mxu0
      %818 = vmatprep.mubr.f32.mxu0 0.0
      %v819 = vand.u32 %v291, 4294901760
      %v820 = vsub.f32 %v291, %v819
      %v821 = vand.u32 %v820, 4294901760
      %822 = vmatmul.mubr.f32.gmra.mrb[0].mxu0 %v821
      %v823 = vpop.f32.mrb[0].mxu0
      %v824 = vadd.f32 %v693, %v823
      %v825 = vpop.f32.mrb[0].mxu0
      %826 = vmatprep.mubr.f32.mxu0 0.0
      %v827 = vand.u32 %v294, 4294901760
      %v828 = vsub.f32 %v294, %v827
      %v829 = vand.u32 %v828, 4294901760
      %830 = vmatmul.mubr.f32.gmra.mrb[0].mxu0 %v829
      %v831 = vpop.f32.mrb[0].mxu0
      %v832 = vadd.f32 %v700, %v831
      %v833 = vpop.f32.mrb[0].mxu0
      %834 = vmatprep.mubr.f32.mxu0 0.0
      %v835 = vand.u32 %v297, 4294901760
      %v836 = vsub.f32 %v297, %v835
      %v837 = vand.u32 %v836, 4294901760
      %838 = vmatmul.mubr.f32.gmra.mrb[0].mxu0 %v837
      %v839 = vpop.f32.mrb[0].mxu0
      %v840 = vadd.f32 %v707, %v839
      %v841 = vpop.f32.mrb[0].mxu0
      %842 = vdwg.mxu0
      %843 = vmatprep.subr.mxu0 0.0
      %v844 = vand.u32 %v266, 4294901760
      %v845 = vsub.f32 %v266, %v844
      %v846 = vand.u32 %v845, 4294901760
      %847 = vmatpush1.msra.mxu0 %v846
      %848 = vmatprep.subr.mxu0 0.0
      %v849 = vand.u32 %v267, 4294901760
      %v850 = vsub.f32 %v267, %v849
      %v851 = vand.u32 %v850, 4294901760
      %852 = vmatpush1.msra.mxu0 %v851
      %853 = vmatprep.subr.mxu0 0.0
      %v854 = vand.u32 %v268, 4294901760
      %v855 = vsub.f32 %v268, %v854
      %v856 = vand.u32 %v855, 4294901760
      %857 = vmatpush1.msra.mxu0 %v856
      %858 = vmatprep.subr.mxu0 0.0
      %v859 = vand.u32 %v269, 4294901760
      %v860 = vsub.f32 %v269, %v859
      %v861 = vand.u32 %v860, 4294901760
      %862 = vmatpush1.msra.mxu0 %v861
      %863 = vmatprep.subr.mxu0 0.0
      %864 = vmatpush1.msra.mxu0 0.0
      %865 = vmatprep.subr.mxu0 0.0
      %866 = vmatpush1.msra.mxu0 0.0
      %867 = vmatprep.subr.mxu0 0.0
      %868 = vmatpush1.msra.mxu0 0.0
      %869 = vmatprep.subr.mxu0 0.0
      %870 = vmatpush1.msra.mxu0 0.0
      %871 = vmatprep.subr.mxu0 0.0
      %872 = vmatpush1.msra.mxu0 0.0
      %873 = vmatprep.subr.mxu0 0.0
      %874 = vmatpush1.msra.mxu0 0.0
      %875 = vmatprep.subr.mxu0 0.0
      %876 = vmatpush1.msra.mxu0 0.0
      %877 = vmatprep.subr.mxu0 0.0
      %878 = vmatpush1.msra.mxu0 0.0
      %879 = vmatprep.subr.mxu0 0.0
      %880 = vmatpush1.msra.mxu0 0.0
      %881 = vmatprep.subr.mxu0 0.0
      %882 = vmatpush1.msra.mxu0 0.0
      %883 = vmatprep.subr.mxu0 0.0
      %884 = vmatpush1.msra.mxu0 0.0
      %885 = vmatprep.subr.mxu0 0.0
      %886 = vmatpush1.msra.mxu0 0.0
      %887 = vmatprep.subr.mxu0 0.0
      %888 = vmatpush1.msra.mxu0 0.0
      %889 = vmatprep.subr.mxu0 0.0
      %890 = vmatpush1.msra.mxu0 0.0
      %891 = vmatprep.subr.mxu0 0.0
      %892 = vmatpush1.msra.mxu0 0.0
      %893 = vmatprep.subr.mxu0 0.0
      %894 = vmatpush1.msra.mxu0 0.0
      %895 = vmatprep.subr.mxu0 0.0
      %896 = vmatpush1.msra.mxu0 0.0
      %897 = vmatprep.subr.mxu0 0.0
      %898 = vmatpush1.msra.mxu0 0.0
      %899 = vmatprep.subr.mxu0 0.0
      %900 = vmatpush1.msra.mxu0 0.0
      %901 = vmatprep.subr.mxu0 0.0
      %902 = vmatpush1.msra.mxu0 0.0
      %903 = vmatprep.subr.mxu0 0.0
      %904 = vmatpush1.msra.mxu0 0.0
      %905 = vmatprep.subr.mxu0 0.0
      %906 = vmatpush1.msra.mxu0 0.0
      %907 = vmatprep.subr.mxu0 0.0
      %908 = vmatpush1.msra.mxu0 0.0
      %909 = vmatprep.subr.mxu0 0.0
      %910 = vmatpush1.msra.mxu0 0.0
      %911 = vmatprep.subr.mxu0 0.0
      %912 = vmatpush1.msra.mxu0 0.0
      %913 = vmatprep.subr.mxu0 0.0
      %914 = vmatpush1.msra.mxu0 0.0
      %915 = vmatprep.subr.mxu0 0.0
      %916 = vmatpush1.msra.mxu0 0.0
      %917 = vmatprep.subr.mxu0 0.0
      %918 = vmatpush1.msra.mxu0 0.0
      %919 = vmatprep.mubr.f32.mxu0 0.0
      %v920 = vand.u32 %v276, 4294901760
      %921 = vmatmul.mubr.f32.gmra.mrb[0].mxu0 %v920
      %v922 = vpop.f32.mrb[0].mxu0
      %v923 = vadd.f32 %v784, %v922
      %v924 = vpop.f32.mrb[0].mxu0
      %925 = vmatprep.mubr.f32.mxu0 0.0
      %v926 = vand.u32 %v279, 4294901760
      %927 = vmatmul.mubr.f32.gmra.mrb[0].mxu0 %v926
      %v928 = vpop.f32.mrb[0].mxu0
      %v929 = vadd.f32 %v792, %v928
      %v930 = vpop.f32.mrb[0].mxu0
      %931 = vmatprep.mubr.f32.mxu0 0.0
      %v932 = vand.u32 %v282, 4294901760
      %933 = vmatmul.mubr.f32.gmra.mrb[0].mxu0 %v932
      %v934 = vpop.f32.mrb[0].mxu0
      %v935 = vadd.f32 %v800, %v934
      %v936 = vpop.f32.mrb[0].mxu0
      %937 = vmatprep.mubr.f32.mxu0 0.0
      %v938 = vand.u32 %v285, 4294901760
      %939 = vmatmul.mubr.f32.gmra.mrb[0].mxu0 %v938
      %v940 = vpop.f32.mrb[0].mxu0
      %v941 = vadd.f32 %v808, %v940
      %v942 = vpop.f32.mrb[0].mxu0
      %943 = vmatprep.mubr.f32.mxu0 0.0
      %v944 = vand.u32 %v288, 4294901760
      %945 = vmatmul.mubr.f32.gmra.mrb[0].mxu0 %v944
      %v946 = vpop.f32.mrb[0].mxu0
      %v947 = vadd.f32 %v816, %v946
      %v948 = vpop.f32.mrb[0].mxu0
      %949 = vmatprep.mubr.f32.mxu0 0.0
      %v950 = vand.u32 %v291, 4294901760
      %951 = vmatmul.mubr.f32.gmra.mrb[0].mxu0 %v950
      %v952 = vpop.f32.mrb[0].mxu0
      %v953 = vadd.f32 %v824, %v952
      %v954 = vpop.f32.mrb[0].mxu0
      %955 = vmatprep.mubr.f32.mxu0 0.0
      %v956 = vand.u32 %v294, 4294901760
      %957 = vmatmul.mubr.f32.gmra.mrb[0].mxu0 %v956
      %v958 = vpop.f32.mrb[0].mxu0
      %v959 = vadd.f32 %v832, %v958
      %v960 = vpop.f32.mrb[0].mxu0
      %961 = vmatprep.mubr.f32.mxu0 0.0
      %v962 = vand.u32 %v297, 4294901760
      %963 = vmatmul.mubr.f32.gmra.mrb[0].mxu0 %v962
      %v964 = vpop.f32.mrb[0].mxu0
      %v965 = vadd.f32 %v840, %v964
      %v966 = vpop.f32.mrb[0].mxu0
      %967 = vdwg.mxu0
      %968 = vmatprep.subr.mxu0 0.0
      %v969 = vand.u32 %v266, 4294901760
      %970 = vmatpush1.msra.mxu0 %v969
      %971 = vmatprep.subr.mxu0 0.0
      %v972 = vand.u32 %v267, 4294901760
      %973 = vmatpush1.msra.mxu0 %v972
      %974 = vmatprep.subr.mxu0 0.0
      %v975 = vand.u32 %v268, 4294901760
      %976 = vmatpush1.msra.mxu0 %v975
      %977 = vmatprep.subr.mxu0 0.0
      %v978 = vand.u32 %v269, 4294901760
      %979 = vmatpush1.msra.mxu0 %v978
      %980 = vmatprep.subr.mxu0 0.0
      %981 = vmatpush1.msra.mxu0 0.0
      %982 = vmatprep.subr.mxu0 0.0
      %983 = vmatpush1.msra.mxu0 0.0
      %984 = vmatprep.subr.mxu0 0.0
      %985 = vmatpush1.msra.mxu0 0.0
      %986 = vmatprep.subr.mxu0 0.0
      %987 = vmatpush1.msra.mxu0 0.0
      %988 = vmatprep.subr.mxu0 0.0
      %989 = vmatpush1.msra.mxu0 0.0
      %990 = vmatprep.subr.mxu0 0.0
      %991 = vmatpush1.msra.mxu0 0.0
      %992 = vmatprep.subr.mxu0 0.0
      %993 = vmatpush1.msra.mxu0 0.0
      %994 = vmatprep.subr.mxu0 0.0
      %995 = vmatpush1.msra.mxu0 0.0
      %996 = vmatprep.subr.mxu0 0.0
      %997 = vmatpush1.msra.mxu0 0.0
      %998 = vmatprep.subr.mxu0 0.0
      %999 = vmatpush1.msra.mxu0 0.0
      %1000 = vmatprep.subr.mxu0 0.0
      %1001 = vmatpush1.msra.mxu0 0.0
      %1002 = vmatprep.subr.mxu0 0.0
      %1003 = vmatpush1.msra.mxu0 0.0
      %1004 = vmatprep.subr.mxu0 0.0
      %1005 = vmatpush1.msra.mxu0 0.0
      %1006 = vmatprep.subr.mxu0 0.0
      %1007 = vmatpush1.msra.mxu0 0.0
      %1008 = vmatprep.subr.mxu0 0.0
      %1009 = vmatpush1.msra.mxu0 0.0
      %1010 = vmatprep.subr.mxu0 0.0
      %1011 = vmatpush1.msra.mxu0 0.0
      %1012 = vmatprep.subr.mxu0 0.0
      %1013 = vmatpush1.msra.mxu0 0.0
      %1014 = vmatprep.subr.mxu0 0.0
      %1015 = vmatpush1.msra.mxu0 0.0
      %1016 = vmatprep.subr.mxu0 0.0
      %1017 = vmatpush1.msra.mxu0 0.0
      %1018 = vmatprep.subr.mxu0 0.0
      %1019 = vmatpush1.msra.mxu0 0.0
      %1020 = vmatprep.subr.mxu0 0.0
      %1021 = vmatpush1.msra.mxu0 0.0
      %1022 = vmatprep.subr.mxu0 0.0
      %1023 = vmatpush1.msra.mxu0 0.0
      %1024 = vmatprep.subr.mxu0 0.0
      %1025 = vmatpush1.msra.mxu0 0.0
      %1026 = vmatprep.subr.mxu0 0.0
      %1027 = vmatpush1.msra.mxu0 0.0
      %1028 = vmatprep.subr.mxu0 0.0
      %1029 = vmatpush1.msra.mxu0 0.0
      %1030 = vmatprep.subr.mxu0 0.0
      %1031 = vmatpush1.msra.mxu0 0.0
      %1032 = vmatprep.subr.mxu0 0.0
      %1033 = vmatpush1.msra.mxu0 0.0
      %1034 = vmatprep.subr.mxu0 0.0
      %1035 = vmatpush1.msra.mxu0 0.0
      %1036 = vmatprep.mubr.f32.mxu0 0.0
      %v1037 = vand.u32 %v276, 4294901760
      %1038 = vmatmul.mubr.f32.gmra.mrb[0].mxu0 %v1037
      %v1039 = vpop.f32.mrb[0].mxu0
      %v1040 = vadd.f32 %v923, %v1039
      %v1041 = vpop.f32.mrb[0].mxu0
      %1042 = vmatprep.mubr.f32.mxu0 0.0
      %v1043 = vand.u32 %v279, 4294901760
      %1044 = vmatmul.mubr.f32.gmra.mrb[0].mxu0 %v1043
      %v1045 = vpop.f32.mrb[0].mxu0
      %v1046 = vadd.f32 %v929, %v1045
      %v1047 = vpop.f32.mrb[0].mxu0
      %1048 = vmatprep.mubr.f32.mxu0 0.0
      %v1049 = vand.u32 %v282, 4294901760
      %1050 = vmatmul.mubr.f32.gmra.mrb[0].mxu0 %v1049
      %v1051 = vpop.f32.mrb[0].mxu0
      %v1052 = vadd.f32 %v935, %v1051
      %v1053 = vpop.f32.mrb[0].mxu0
      %1054 = vmatprep.mubr.f32.mxu0 0.0
      %v1055 = vand.u32 %v285, 4294901760
      %1056 = vmatmul.mubr.f32.gmra.mrb[0].mxu0 %v1055
      %v1057 = vpop.f32.mrb[0].mxu0
      %v1058 = vadd.f32 %v941, %v1057
      %v1059 = vpop.f32.mrb[0].mxu0
      %1060 = vmatprep.mubr.f32.mxu0 0.0
      %v1061 = vand.u32 %v288, 4294901760
      %1062 = vmatmul.mubr.f32.gmra.mrb[0].mxu0 %v1061
      %v1063 = vpop.f32.mrb[0].mxu0
      %v1064 = vadd.f32 %v947, %v1063
      %v1065 = vpop.f32.mrb[0].mxu0
      %1066 = vmatprep.mubr.f32.mxu0 0.0
      %v1067 = vand.u32 %v291, 4294901760
      %1068 = vmatmul.mubr.f32.gmra.mrb[0].mxu0 %v1067
      %v1069 = vpop.f32.mrb[0].mxu0
      %v1070 = vadd.f32 %v953, %v1069
      %v1071 = vpop.f32.mrb[0].mxu0
      %1072 = vmatprep.mubr.f32.mxu0 0.0
      %v1073 = vand.u32 %v294, 4294901760
      %1074 = vmatmul.mubr.f32.gmra.mrb[0].mxu0 %v1073
      %v1075 = vpop.f32.mrb[0].mxu0
      %v1076 = vadd.f32 %v959, %v1075
      %v1077 = vpop.f32.mrb[0].mxu0
      %1078 = vmatprep.mubr.f32.mxu0 0.0
      %v1079 = vand.u32 %v297, 4294901760
      %1080 = vmatmul.mubr.f32.gmra.mrb[0].mxu0 %v1079
      %v1081 = vpop.f32.mrb[0].mxu0
      %v1082 = vadd.f32 %v965, %v1081
      %v1083 = vpop.f32.mrb[0].mxu0
      %1084 = vdwg.mxu0
      %vm1085 = vcmask 523264
      %v1086 = vsel %vm1085, %v1040, -inf
      %1087 = vmax.xlane.f32.xlu0 %v1086
      %v1088 = vpop.xlane.xlu0 %1087
      %v1089 = vsel %vm1085, %v1046, -inf
      %1090 = vmax.xlane.f32.xlu0 %v1089
      %v1091 = vpop.xlane.xlu0 %1090
      %v1092 = vsel %vm1085, %v1052, -inf
      %1093 = vmax.xlane.f32.xlu0 %v1092
      %v1094 = vpop.xlane.xlu0 %1093
      %v1095 = vsel %vm1085, %v1058, -inf
      %1096 = vmax.xlane.f32.xlu0 %v1095
      %v1097 = vpop.xlane.xlu0 %1096
      %v1098 = vsel %vm1085, %v1064, -inf
      %1099 = vmax.xlane.f32.xlu0 %v1098
      %v1100 = vpop.xlane.xlu0 %1099
      %v1101 = vsel %vm1085, %v1070, -inf
      %1102 = vmax.xlane.f32.xlu0 %v1101
      %v1103 = vpop.xlane.xlu0 %1102
      %v1104 = vsel %vm1085, %v1076, -inf
      %1105 = vmax.xlane.f32.xlu0 %v1104
      %v1106 = vpop.xlane.xlu0 %1105
      %v1107 = vsel %vm1085, %v1082, -inf
      %1108 = vmax.xlane.f32.xlu0 %v1107
      %v1109 = vpop.xlane.xlu0 %1108
      %vm1110 = vcmp.lt.f32.partialorder %v1040, %v1088
      %vm1111 = vcmp.lt.f32.partialorder %v1046, %v1091
      %vm1112 = vcmp.lt.f32.partialorder %v1052, %v1094
      %vm1113 = vcmp.lt.f32.partialorder %v1058, %v1097
      %vm1114 = vcmp.lt.f32.partialorder %v1064, %v1100
      %vm1115 = vcmp.lt.f32.partialorder %v1070, %v1103
      %vm1116 = vcmp.lt.f32.partialorder %v1076, %v1106
      %vm1117 = vcmp.lt.f32.partialorder %v1082, %v1109
      %v1118 = vsel %vm1110, %v1040, -inf
      %v1119 = vsel %vm1111, %v1046, -inf
      %v1120 = vsel %vm1112, %v1052, -inf
      %v1121 = vsel %vm1113, %v1058, -inf
      %v1122 = vsel %vm1114, %v1064, -inf
      %v1123 = vsel %vm1115, %v1070, -inf
      %v1124 = vsel %vm1116, %v1076, -inf
      %v1125 = vsel %vm1117, %v1082, -inf
      %v1126 = vsel %vm1085, %v1118, -inf
      %1127 = vmax.xlane.f32.xlu0 %v1126
      %v1128 = vpop.xlane.xlu0 %1127
      %v1129 = vsel %vm1085, %v1119, -inf
      %1130 = vmax.xlane.f32.xlu0 %v1129
      %v1131 = vpop.xlane.xlu0 %1130
      %v1132 = vsel %vm1085, %v1120, -inf
      %1133 = vmax.xlane.f32.xlu0 %v1132
      %v1134 = vpop.xlane.xlu0 %1133
      %v1135 = vsel %vm1085, %v1121, -inf
      %1136 = vmax.xlane.f32.xlu0 %v1135
      %v1137 = vpop.xlane.xlu0 %1136
      %v1138 = vsel %vm1085, %v1122, -inf
      %1139 = vmax.xlane.f32.xlu0 %v1138
      %v1140 = vpop.xlane.xlu0 %1139
      %v1141 = vsel %vm1085, %v1123, -inf
      %1142 = vmax.xlane.f32.xlu0 %v1141
      %v1143 = vpop.xlane.xlu0 %1142
      %v1144 = vsel %vm1085, %v1124, -inf
      %1145 = vmax.xlane.f32.xlu0 %v1144
      %v1146 = vpop.xlane.xlu0 %1145
      %v1147 = vsel %vm1085, %v1125, -inf
      %1148 = vmax.xlane.f32.xlu0 %v1147
      %v1149 = vpop.xlane.xlu0 %1148
      %vm1150 = vcmp.lt.f32.partialorder %v1040, %v1128
      %vm1151 = vcmp.lt.f32.partialorder %v1046, %v1131
      %vm1152 = vcmp.lt.f32.partialorder %v1052, %v1134
      %vm1153 = vcmp.lt.f32.partialorder %v1058, %v1137
      %vm1154 = vcmp.lt.f32.partialorder %v1064, %v1140
      %vm1155 = vcmp.lt.f32.partialorder %v1070, %v1143
      %vm1156 = vcmp.lt.f32.partialorder %v1076, %v1146
      %vm1157 = vcmp.lt.f32.partialorder %v1082, %v1149
      %v1158 = vsel %vm1150, %v1040, -inf
      %v1159 = vsel %vm1151, %v1046, -inf
      %v1160 = vsel %vm1152, %v1052, -inf
      %v1161 = vsel %vm1153, %v1058, -inf
      %v1162 = vsel %vm1154, %v1064, -inf
      %v1163 = vsel %vm1155, %v1070, -inf
      %v1164 = vsel %vm1156, %v1076, -inf
      %v1165 = vsel %vm1157, %v1082, -inf
      %v1166 = vsel %vm1085, %v1158, -inf
      %1167 = vmax.xlane.f32.xlu0 %v1166
      %v1168 = vpop.xlane.xlu0 %1167
      %v1169 = vsel %vm1085, %v1159, -inf
      %1170 = vmax.xlane.f32.xlu0 %v1169
      %v1171 = vpop.xlane.xlu0 %1170
      %v1172 = vsel %vm1085, %v1160, -inf
      %1173 = vmax.xlane.f32.xlu0 %v1172
      %v1174 = vpop.xlane.xlu0 %1173
      %v1175 = vsel %vm1085, %v1161, -inf
      %1176 = vmax.xlane.f32.xlu0 %v1175
      %v1177 = vpop.xlane.xlu0 %1176
      %v1178 = vsel %vm1085, %v1162, -inf
      %1179 = vmax.xlane.f32.xlu0 %v1178
      %v1180 = vpop.xlane.xlu0 %1179
      %v1181 = vsel %vm1085, %v1163, -inf
      %1182 = vmax.xlane.f32.xlu0 %v1181
      %v1183 = vpop.xlane.xlu0 %1182
      %v1184 = vsel %vm1085, %v1164, -inf
      %1185 = vmax.xlane.f32.xlu0 %v1184
      %v1186 = vpop.xlane.xlu0 %1185
      %v1187 = vsel %vm1085, %v1165, -inf
      %1188 = vmax.xlane.f32.xlu0 %v1187
      %v1189 = vpop.xlane.xlu0 %1188
      %vm1190 = vcmp.lt.f32.partialorder %v1040, %v1168
      %vm1191 = vcmp.lt.f32.partialorder %v1046, %v1171
      %vm1192 = vcmp.lt.f32.partialorder %v1052, %v1174
      %vm1193 = vcmp.lt.f32.partialorder %v1058, %v1177
      %vm1194 = vcmp.lt.f32.partialorder %v1064, %v1180
      %vm1195 = vcmp.lt.f32.partialorder %v1070, %v1183
      %vm1196 = vcmp.lt.f32.partialorder %v1076, %v1186
      %vm1197 = vcmp.lt.f32.partialorder %v1082, %v1189
      %v1198 = vsel %vm1190, %v1040, -inf
      %v1199 = vsel %vm1191, %v1046, -inf
      %v1200 = vsel %vm1192, %v1052, -inf
      %v1201 = vsel %vm1193, %v1058, -inf
      %v1202 = vsel %vm1194, %v1064, -inf
      %v1203 = vsel %vm1195, %v1070, -inf
      %v1204 = vsel %vm1196, %v1076, -inf
      %v1205 = vsel %vm1197, %v1082, -inf
      %v1206 = vsel %vm1085, %v1198, -inf
      %1207 = vmax.xlane.f32.xlu0 %v1206
      %v1208 = vpop.xlane.xlu0 %1207
      %v1209 = vsel %vm1085, %v1199, -inf
      %1210 = vmax.xlane.f32.xlu0 %v1209
      %v1211 = vpop.xlane.xlu0 %1210
      %v1212 = vsel %vm1085, %v1200, -inf
      %1213 = vmax.xlane.f32.xlu0 %v1212
      %v1214 = vpop.xlane.xlu0 %1213
      %v1215 = vsel %vm1085, %v1201, -inf
      %1216 = vmax.xlane.f32.xlu0 %v1215
      %v1217 = vpop.xlane.xlu0 %1216
      %v1218 = vsel %vm1085, %v1202, -inf
      %1219 = vmax.xlane.f32.xlu0 %v1218
      %v1220 = vpop.xlane.xlu0 %1219
      %v1221 = vsel %vm1085, %v1203, -inf
      %1222 = vmax.xlane.f32.xlu0 %v1221
      %v1223 = vpop.xlane.xlu0 %1222
      %v1224 = vsel %vm1085, %v1204, -inf
      %1225 = vmax.xlane.f32.xlu0 %v1224
      %v1226 = vpop.xlane.xlu0 %1225
      %v1227 = vsel %vm1085, %v1205, -inf
      %1228 = vmax.xlane.f32.xlu0 %v1227
      %v1229 = vpop.xlane.xlu0 %1228
      %vm1230 = vcmp.lt.f32.partialorder %v1040, %v1208
      %vm1231 = vcmp.lt.f32.partialorder %v1046, %v1211
      %vm1232 = vcmp.lt.f32.partialorder %v1052, %v1214
      %vm1233 = vcmp.lt.f32.partialorder %v1058, %v1217
      %vm1234 = vcmp.lt.f32.partialorder %v1064, %v1220
      %vm1235 = vcmp.lt.f32.partialorder %v1070, %v1223
      %vm1236 = vcmp.lt.f32.partialorder %v1076, %v1226
      %vm1237 = vcmp.lt.f32.partialorder %v1082, %v1229
      %v1238 = vsel %vm1230, %v1040, -inf
      %v1239 = vsel %vm1231, %v1046, -inf
      %v1240 = vsel %vm1232, %v1052, -inf
      %v1241 = vsel %vm1233, %v1058, -inf
      %v1242 = vsel %vm1234, %v1064, -inf
      %v1243 = vsel %vm1235, %v1070, -inf
      %v1244 = vsel %vm1236, %v1076, -inf
      %v1245 = vsel %vm1237, %v1082, -inf
      %v1246 = vsel %vm1085, %v1238, -inf
      %1247 = vmax.xlane.f32.xlu0 %v1246
      %v1248 = vpop.xlane.xlu0 %1247
      %v1249 = vsel %vm1085, %v1239, -inf
      %1250 = vmax.xlane.f32.xlu0 %v1249
      %v1251 = vpop.xlane.xlu0 %1250
      %v1252 = vsel %vm1085, %v1240, -inf
      %1253 = vmax.xlane.f32.xlu0 %v1252
      %v1254 = vpop.xlane.xlu0 %1253
      %v1255 = vsel %vm1085, %v1241, -inf
      %1256 = vmax.xlane.f32.xlu0 %v1255
      %v1257 = vpop.xlane.xlu0 %1256
      %v1258 = vsel %vm1085, %v1242, -inf
      %1259 = vmax.xlane.f32.xlu0 %v1258
      %v1260 = vpop.xlane.xlu0 %1259
      %v1261 = vsel %vm1085, %v1243, -inf
      %1262 = vmax.xlane.f32.xlu0 %v1261
      %v1263 = vpop.xlane.xlu0 %1262
      %v1264 = vsel %vm1085, %v1244, -inf
      %1265 = vmax.xlane.f32.xlu0 %v1264
      %v1266 = vpop.xlane.xlu0 %1265
      %v1267 = vsel %vm1085, %v1245, -inf
      %1268 = vmax.xlane.f32.xlu0 %v1267
      %v1269 = vpop.xlane.xlu0 %1268
      %vm1270 = vcmp.lt.f32.partialorder %v1040, %v1248
      %vm1271 = vcmp.lt.f32.partialorder %v1046, %v1251
      %vm1272 = vcmp.lt.f32.partialorder %v1052, %v1254
      %vm1273 = vcmp.lt.f32.partialorder %v1058, %v1257
      %vm1274 = vcmp.lt.f32.partialorder %v1064, %v1260
      %vm1275 = vcmp.lt.f32.partialorder %v1070, %v1263
      %vm1276 = vcmp.lt.f32.partialorder %v1076, %v1266
      %vm1277 = vcmp.lt.f32.partialorder %v1082, %v1269
      %v1278 = vsel %vm1270, %v1040, -inf
      %v1279 = vsel %vm1271, %v1046, -inf
      %v1280 = vsel %vm1272, %v1052, -inf
      %v1281 = vsel %vm1273, %v1058, -inf
      %v1282 = vsel %vm1274, %v1064, -inf
      %v1283 = vsel %vm1275, %v1070, -inf
      %v1284 = vsel %vm1276, %v1076, -inf
      %v1285 = vsel %vm1277, %v1082, -inf
      %v1286 = vsel %vm1085, %v1278, -inf
      %1287 = vmax.xlane.f32.xlu0 %v1286
      %v1288 = vpop.xlane.xlu0 %1287
      %v1289 = vsel %vm1085, %v1279, -inf
      %1290 = vmax.xlane.f32.xlu0 %v1289
      %v1291 = vpop.xlane.xlu0 %1290
      %v1292 = vsel %vm1085, %v1280, -inf
      %1293 = vmax.xlane.f32.xlu0 %v1292
      %v1294 = vpop.xlane.xlu0 %1293
      %v1295 = vsel %vm1085, %v1281, -inf
      %1296 = vmax.xlane.f32.xlu0 %v1295
      %v1297 = vpop.xlane.xlu0 %1296
      %v1298 = vsel %vm1085, %v1282, -inf
      %1299 = vmax.xlane.f32.xlu0 %v1298
      %v1300 = vpop.xlane.xlu0 %1299
      %v1301 = vsel %vm1085, %v1283, -inf
      %1302 = vmax.xlane.f32.xlu0 %v1301
      %v1303 = vpop.xlane.xlu0 %1302
      %v1304 = vsel %vm1085, %v1284, -inf
      %1305 = vmax.xlane.f32.xlu0 %v1304
      %v1306 = vpop.xlane.xlu0 %1305
      %v1307 = vsel %vm1085, %v1285, -inf
      %1308 = vmax.xlane.f32.xlu0 %v1307
      %v1309 = vpop.xlane.xlu0 %1308
      %vm1310 = vcmp.lt.f32.partialorder %v1040, %v1288
      %vm1311 = vcmp.lt.f32.partialorder %v1046, %v1291
      %vm1312 = vcmp.lt.f32.partialorder %v1052, %v1294
      %vm1313 = vcmp.lt.f32.partialorder %v1058, %v1297
      %vm1314 = vcmp.lt.f32.partialorder %v1064, %v1300
      %vm1315 = vcmp.lt.f32.partialorder %v1070, %v1303
      %vm1316 = vcmp.lt.f32.partialorder %v1076, %v1306
      %vm1317 = vcmp.lt.f32.partialorder %v1082, %v1309
      %v1318 = vsel %vm1310, %v1040, -inf
      %v1319 = vsel %vm1311, %v1046, -inf
      %v1320 = vsel %vm1312, %v1052, -inf
      %v1321 = vsel %vm1313, %v1058, -inf
      %v1322 = vsel %vm1314, %v1064, -inf
      %v1323 = vsel %vm1315, %v1070, -inf
      %v1324 = vsel %vm1316, %v1076, -inf
      %v1325 = vsel %vm1317, %v1082, -inf
      %v1326 = vsel %vm1085, %v1318, -inf
      %1327 = vmax.xlane.f32.xlu0 %v1326
      %v1328 = vpop.xlane.xlu0 %1327
      %v1329 = vsel %vm1085, %v1319, -inf
      %1330 = vmax.xlane.f32.xlu0 %v1329
      %v1331 = vpop.xlane.xlu0 %1330
      %v1332 = vsel %vm1085, %v1320, -inf
      %1333 = vmax.xlane.f32.xlu0 %v1332
      %v1334 = vpop.xlane.xlu0 %1333
      %v1335 = vsel %vm1085, %v1321, -inf
      %1336 = vmax.xlane.f32.xlu0 %v1335
      %v1337 = vpop.xlane.xlu0 %1336
      %v1338 = vsel %vm1085, %v1322, -inf
      %1339 = vmax.xlane.f32.xlu0 %v1338
      %v1340 = vpop.xlane.xlu0 %1339
      %v1341 = vsel %vm1085, %v1323, -inf
      %1342 = vmax.xlane.f32.xlu0 %v1341
      %v1343 = vpop.xlane.xlu0 %1342
      %v1344 = vsel %vm1085, %v1324, -inf
      %1345 = vmax.xlane.f32.xlu0 %v1344
      %v1346 = vpop.xlane.xlu0 %1345
      %v1347 = vsel %vm1085, %v1325, -inf
      %1348 = vmax.xlane.f32.xlu0 %v1347
      %v1349 = vpop.xlane.xlu0 %1348
      %vm1350 = vcmp.lt.f32.partialorder %v1040, %v1328
      %vm1351 = vcmp.lt.f32.partialorder %v1046, %v1331
      %vm1352 = vcmp.lt.f32.partialorder %v1052, %v1334
      %vm1353 = vcmp.lt.f32.partialorder %v1058, %v1337
      %vm1354 = vcmp.lt.f32.partialorder %v1064, %v1340
      %vm1355 = vcmp.lt.f32.partialorder %v1070, %v1343
      %vm1356 = vcmp.lt.f32.partialorder %v1076, %v1346
      %vm1357 = vcmp.lt.f32.partialorder %v1082, %v1349
      %v1358 = vsel %vm1350, %v1040, -inf
      %v1359 = vsel %vm1351, %v1046, -inf
      %v1360 = vsel %vm1352, %v1052, -inf
      %v1361 = vsel %vm1353, %v1058, -inf
      %v1362 = vsel %vm1354, %v1064, -inf
      %v1363 = vsel %vm1355, %v1070, -inf
      %v1364 = vsel %vm1356, %v1076, -inf
      %v1365 = vsel %vm1357, %v1082, -inf
      %v1366 = vsel %vm1085, %v1358, -inf
      %1367 = vmax.xlane.f32.xlu0 %v1366
      %v1368 = vpop.xlane.xlu0 %1367
      %v1369 = vsel %vm1085, %v1359, -inf
      %1370 = vmax.xlane.f32.xlu0 %v1369
      %v1371 = vpop.xlane.xlu0 %1370
      %v1372 = vsel %vm1085, %v1360, -inf
      %1373 = vmax.xlane.f32.xlu0 %v1372
      %v1374 = vpop.xlane.xlu0 %1373
      %v1375 = vsel %vm1085, %v1361, -inf
      %1376 = vmax.xlane.f32.xlu0 %v1375
      %v1377 = vpop.xlane.xlu0 %1376
      %v1378 = vsel %vm1085, %v1362, -inf
      %1379 = vmax.xlane.f32.xlu0 %v1378
      %v1380 = vpop.xlane.xlu0 %1379
      %v1381 = vsel %vm1085, %v1363, -inf
      %1382 = vmax.xlane.f32.xlu0 %v1381
      %v1383 = vpop.xlane.xlu0 %1382
      %v1384 = vsel %vm1085, %v1364, -inf
      %1385 = vmax.xlane.f32.xlu0 %v1384
      %v1386 = vpop.xlane.xlu0 %1385
      %v1387 = vsel %vm1085, %v1365, -inf
      %1388 = vmax.xlane.f32.xlu0 %v1387
      %v1389 = vpop.xlane.xlu0 %1388
      %vm1390 = vcmp.lt.f32.partialorder %v1040, %v1368
      %vm1391 = vcmp.lt.f32.partialorder %v1046, %v1371
      %vm1392 = vcmp.lt.f32.partialorder %v1052, %v1374
      %vm1393 = vcmp.lt.f32.partialorder %v1058, %v1377
      %vm1394 = vcmp.lt.f32.partialorder %v1064, %v1380
      %vm1395 = vcmp.lt.f32.partialorder %v1070, %v1383
      %vm1396 = vcmp.lt.f32.partialorder %v1076, %v1386
      %vm1397 = vcmp.lt.f32.partialorder %v1082, %v1389
      %v1398 = vsel %vm1390, %v1040, -inf
      %v1399 = vsel %vm1391, %v1046, -inf
      %v1400 = vsel %vm1392, %v1052, -inf
      %v1401 = vsel %vm1393, %v1058, -inf
      %v1402 = vsel %vm1394, %v1064, -inf
      %v1403 = vsel %vm1395, %v1070, -inf
      %v1404 = vsel %vm1396, %v1076, -inf
      %v1405 = vsel %vm1397, %v1082, -inf
      %v1406 = vsel %vm1085, %v1398, -inf
      %1407 = vmax.xlane.f32.xlu0 %v1406
      %v1408 = vpop.xlane.xlu0 %1407
      %v1409 = vsel %vm1085, %v1399, -inf
      %1410 = vmax.xlane.f32.xlu0 %v1409
      %v1411 = vpop.xlane.xlu0 %1410
      %v1412 = vsel %vm1085, %v1400, -inf
      %1413 = vmax.xlane.f32.xlu0 %v1412
      %v1414 = vpop.xlane.xlu0 %1413
      %v1415 = vsel %vm1085, %v1401, -inf
      %1416 = vmax.xlane.f32.xlu0 %v1415
      %v1417 = vpop.xlane.xlu0 %1416
      %v1418 = vsel %vm1085, %v1402, -inf
      %1419 = vmax.xlane.f32.xlu0 %v1418
      %v1420 = vpop.xlane.xlu0 %1419
      %v1421 = vsel %vm1085, %v1403, -inf
      %1422 = vmax.xlane.f32.xlu0 %v1421
      %v1423 = vpop.xlane.xlu0 %1422
      %v1424 = vsel %vm1085, %v1404, -inf
      %1425 = vmax.xlane.f32.xlu0 %v1424
      %v1426 = vpop.xlane.xlu0 %1425
      %v1427 = vsel %vm1085, %v1405, -inf
      %1428 = vmax.xlane.f32.xlu0 %v1427
      %v1429 = vpop.xlane.xlu0 %1428
      %vm1430 = vcmp.ge.f32.partialorder %v1040, %v1408
      %vm1431 = vcmp.ge.f32.partialorder %v1046, %v1411
      %vm1432 = vcmp.ge.f32.partialorder %v1052, %v1414
      %vm1433 = vcmp.ge.f32.partialorder %v1058, %v1417
      %vm1434 = vcmp.ge.f32.partialorder %v1064, %v1420
      %vm1435 = vcmp.ge.f32.partialorder %v1070, %v1423
      %vm1436 = vcmp.ge.f32.partialorder %v1076, %v1426
      %vm1437 = vcmp.ge.f32.partialorder %v1082, %v1429
      %v1438 = vsub.f32 %v1040, %v1088
      %v1439 = vsub.f32 %v1046, %v1091
      %v1440 = vsub.f32 %v1052, %v1094
      %v1441 = vsub.f32 %v1058, %v1097
      %v1442 = vsub.f32 %v1064, %v1100
      %v1443 = vsub.f32 %v1070, %v1103
      %v1444 = vsub.f32 %v1076, %v1106
      %v1445 = vsub.f32 %v1082, %v1109
      %v1446 = vmul.f32 %v1438, 1.442695
      %v1447 = vpow.pop %v1446
      %v1448 = vmul.f32 %v1439, 1.442695
      %v1449 = vpow.pop %v1448
      %v1450 = vmul.f32 %v1440, 1.442695
      %v1451 = vpow.pop %v1450
      %v1452 = vmul.f32 %v1441, 1.442695
      %v1453 = vpow.pop %v1452
      %v1454 = vmul.f32 %v1442, 1.442695
      %v1455 = vpow.pop %v1454
      %v1456 = vmul.f32 %v1443, 1.442695
      %v1457 = vpow.pop %v1456
      %v1458 = vmul.f32 %v1444, 1.442695
      %v1459 = vpow.pop %v1458
      %v1460 = vmul.f32 %v1445, 1.442695
      %v1461 = vpow.pop %v1460
      %v1462 = vsel %vm1430, %v1447, 0.0
      %v1463 = vsel %vm1431, %v1449, 0.0
      %v1464 = vsel %vm1432, %v1451, 0.0
      %v1465 = vsel %vm1433, %v1453, 0.0
      %v1466 = vsel %vm1434, %v1455, 0.0
      %v1467 = vsel %vm1435, %v1457, 0.0
      %v1468 = vsel %vm1436, %v1459, 0.0
      %v1469 = vsel %vm1437, %v1461, 0.0
      %v1470 = vsel %vm1085, %v1462, 0.0
      %1471 = vadd.xlane.f32.xlu0 %v1470
      %v1472 = vpop.xlane.xlu0 %1471
      %v1473 = vsel %vm1085, %v1463, 0.0
      %1474 = vadd.xlane.f32.xlu0 %v1473
      %v1475 = vpop.xlane.xlu0 %1474
      %v1476 = vsel %vm1085, %v1464, 0.0
      %1477 = vadd.xlane.f32.xlu0 %v1476
      %v1478 = vpop.xlane.xlu0 %1477
      %v1479 = vsel %vm1085, %v1465, 0.0
      %1480 = vadd.xlane.f32.xlu0 %v1479
      %v1481 = vpop.xlane.xlu0 %1480
      %v1482 = vsel %vm1085, %v1466, 0.0
      %1483 = vadd.xlane.f32.xlu0 %v1482
      %v1484 = vpop.xlane.xlu0 %1483
      %v1485 = vsel %vm1085, %v1467, 0.0
      %1486 = vadd.xlane.f32.xlu0 %v1485
      %v1487 = vpop.xlane.xlu0 %1486
      %v1488 = vsel %vm1085, %v1468, 0.0
      %1489 = vadd.xlane.f32.xlu0 %v1488
      %v1490 = vpop.xlane.xlu0 %1489
      %v1491 = vsel %vm1085, %v1469, 0.0
      %1492 = vadd.xlane.f32.xlu0 %v1491
      %v1493 = vpop.xlane.xlu0 %1492
      %v1495 = vsel %vm1085, %v1462, 0
      %v1498 = vsel %vm1085, %v1463, 0
      %v1501 = vsel %vm1085, %v1464, 0
      %v1504 = vsel %vm1085, %v1465, 0
      %v1507 = vsel %vm1085, %v1466, 0
      %v1510 = vsel %vm1085, %v1467, 0
      %v1513 = vsel %vm1085, %v1468, 0
      %v1516 = vsel %vm1085, %v1469, 0
      %v1519 = vsel %vm1085, %v270, 0
      %v1522 = vsel %vm1085, %v271, 0
      %v1525 = vsel %vm1085, %v272, 0
      %v1528 = vsel %vm1085, %v273, 0
      %1530 = vmatprep.subr.mxu0 0.0
      %v1531 = vand.u32 %v1519, 4294901760
      %1532 = vmatpush1.xpose.msra.mxu0 %v1531
      %1533 = vmatprep.subr.mxu0 0.0
      %v1534 = vand.u32 %v1522, 4294901760
      %1535 = vmatpush1.xpose.msra.mxu0 %v1534
      %1536 = vmatprep.subr.mxu0 0.0
      %v1537 = vand.u32 %v1525, 4294901760
      %1538 = vmatpush1.xpose.msra.mxu0 %v1537
      %1539 = vmatprep.subr.mxu0 0.0
      %v1540 = vand.u32 %v1528, 4294901760
      %1541 = vmatpush1.xpose.msra.mxu0 %v1540
      %1542 = vmatprep.subr.mxu0 0.0
      %1543 = vmatpush1.xpose.msra.mxu0 0.0
      %1544 = vmatprep.subr.mxu0 0.0
      %1545 = vmatpush1.xpose.msra.mxu0 0.0
      %1546 = vmatprep.subr.mxu0 0.0
      %1547 = vmatpush1.xpose.msra.mxu0 0.0
      %1548 = vmatprep.subr.mxu0 0.0
      %1549 = vmatpush1.xpose.msra.mxu0 0.0
      %1550 = vmatprep.subr.mxu0 0.0
      %1551 = vmatpush1.xpose.msra.mxu0 0.0
      %1552 = vmatprep.subr.mxu0 0.0
      %1553 = vmatpush1.xpose.msra.mxu0 0.0
      %1554 = vmatprep.subr.mxu0 0.0
      %1555 = vmatpush1.xpose.msra.mxu0 0.0
      %1556 = vmatprep.subr.mxu0 0.0
      %1557 = vmatpush1.xpose.msra.mxu0 0.0
      %1558 = vmatprep.subr.mxu0 0.0
      %1559 = vmatpush1.xpose.msra.mxu0 0.0
      %1560 = vmatprep.subr.mxu0 0.0
      %1561 = vmatpush1.xpose.msra.mxu0 0.0
      %1562 = vmatprep.subr.mxu0 0.0
      %1563 = vmatpush1.xpose.msra.mxu0 0.0
      %1564 = vmatprep.subr.mxu0 0.0
      %1565 = vmatpush1.xpose.msra.mxu0 0.0
      %1566 = vmatprep.subr.mxu0 0.0
      %1567 = vmatpush1.xpose.msra.mxu0 0.0
      %1568 = vmatprep.subr.mxu0 0.0
      %1569 = vmatpush1.xpose.msra.mxu0 0.0
      %1570 = vmatprep.subr.mxu0 0.0
      %1571 = vmatpush1.xpose.msra.mxu0 0.0
      %1572 = vmatprep.subr.mxu0 0.0
      %1573 = vmatpush1.xpose.msra.mxu0 0.0
      %1574 = vmatprep.subr.mxu0 0.0
      %1575 = vmatpush1.xpose.msra.mxu0 0.0
      %1576 = vmatprep.subr.mxu0 0.0
      %1577 = vmatpush1.xpose.msra.mxu0 0.0
      %1578 = vmatprep.subr.mxu0 0.0
      %1579 = vmatpush1.xpose.msra.mxu0 0.0
      %1580 = vmatprep.subr.mxu0 0.0
      %1581 = vmatpush1.xpose.msra.mxu0 0.0
      %1582 = vmatprep.subr.mxu0 0.0
      %1583 = vmatpush1.xpose.msra.mxu0 0.0
      %1584 = vmatprep.subr.mxu0 0.0
      %1585 = vmatpush1.xpose.msra.mxu0 0.0
      %1586 = vmatprep.subr.mxu0 0.0
      %1587 = vmatpush1.xpose.msra.mxu0 0.0
      %1588 = vmatprep.subr.mxu0 0.0
      %1589 = vmatpush1.xpose.msra.mxu0 0.0
      %1590 = vmatprep.subr.mxu0 0.0
      %1591 = vmatpush1.xpose.msra.mxu0 0.0
      %1592 = vmatprep.subr.mxu0 0.0
      %1593 = vmatpush1.xpose.msra.mxu0 0.0
      %1594 = vmatprep.subr.mxu0 0.0
      %1595 = vmatpush1.xpose.msra.mxu0 0.0
      %1596 = vmatprep.subr.mxu0 0.0
      %1597 = vmatpush1.xpose.msra.mxu0 0.0
      %1598 = vmatprep.mubr.f32.mxu0 0.0
      %v1599 = vand.u32 %v1495, 4294901760
      %v1600 = vsub.f32 %v1495, %v1599
      %v1601 = vand.u32 %v1600, 4294901760
      %v1602 = vsub.f32 %v1600, %v1601
      %v1603 = vand.u32 %v1602, 4294901760
      %1604 = vmatmul.mubr.f32.gmra.mrb[0].mxu0 %v1603
      %v1605 = vpop.f32.mrb[0].mxu0
      %v1606 = vadd.f32 0.0, %v1605
      %v1607 = vpop.f32.mrb[0].mxu0
      %1608 = vmatprep.mubr.f32.mxu0 0.0
      %v1609 = vand.u32 %v1498, 4294901760
      %v1610 = vsub.f32 %v1498, %v1609
      %v1611 = vand.u32 %v1610, 4294901760
      %v1612 = vsub.f32 %v1610, %v1611
      %v1613 = vand.u32 %v1612, 4294901760
      %1614 = vmatmul.mubr.f32.gmra.mrb[0].mxu0 %v1613
      %v1615 = vpop.f32.mrb[0].mxu0
      %v1616 = vadd.f32 0.0, %v1615
      %v1617 = vpop.f32.mrb[0].mxu0
      %1618 = vmatprep.mubr.f32.mxu0 0.0
      %v1619 = vand.u32 %v1501, 4294901760
      %v1620 = vsub.f32 %v1501, %v1619
      %v1621 = vand.u32 %v1620, 4294901760
      %v1622 = vsub.f32 %v1620, %v1621
      %v1623 = vand.u32 %v1622, 4294901760
      %1624 = vmatmul.mubr.f32.gmra.mrb[0].mxu0 %v1623
      %v1625 = vpop.f32.mrb[0].mxu0
      %v1626 = vadd.f32 0.0, %v1625
      %v1627 = vpop.f32.mrb[0].mxu0
      %1628 = vmatprep.mubr.f32.mxu0 0.0
      %v1629 = vand.u32 %v1504, 4294901760
      %v1630 = vsub.f32 %v1504, %v1629
      %v1631 = vand.u32 %v1630, 4294901760
      %v1632 = vsub.f32 %v1630, %v1631
      %v1633 = vand.u32 %v1632, 4294901760
      %1634 = vmatmul.mubr.f32.gmra.mrb[0].mxu0 %v1633
      %v1635 = vpop.f32.mrb[0].mxu0
      %v1636 = vadd.f32 0.0, %v1635
      %v1637 = vpop.f32.mrb[0].mxu0
      %1638 = vmatprep.mubr.f32.mxu0 0.0
      %v1639 = vand.u32 %v1507, 4294901760
      %v1640 = vsub.f32 %v1507, %v1639
      %v1641 = vand.u32 %v1640, 4294901760
      %v1642 = vsub.f32 %v1640, %v1641
      %v1643 = vand.u32 %v1642, 4294901760
      %1644 = vmatmul.mubr.f32.gmra.mrb[0].mxu0 %v1643
      %v1645 = vpop.f32.mrb[0].mxu0
      %v1646 = vadd.f32 0.0, %v1645
      %v1647 = vpop.f32.mrb[0].mxu0
      %1648 = vmatprep.mubr.f32.mxu0 0.0
      %v1649 = vand.u32 %v1510, 4294901760
      %v1650 = vsub.f32 %v1510, %v1649
      %v1651 = vand.u32 %v1650, 4294901760
      %v1652 = vsub.f32 %v1650, %v1651
      %v1653 = vand.u32 %v1652, 4294901760
      %1654 = vmatmul.mubr.f32.gmra.mrb[0].mxu0 %v1653
      %v1655 = vpop.f32.mrb[0].mxu0
      %v1656 = vadd.f32 0.0, %v1655
      %v1657 = vpop.f32.mrb[0].mxu0
      %1658 = vmatprep.mubr.f32.mxu0 0.0
      %v1659 = vand.u32 %v1513, 4294901760
      %v1660 = vsub.f32 %v1513, %v1659
      %v1661 = vand.u32 %v1660, 4294901760
      %v1662 = vsub.f32 %v1660, %v1661
      %v1663 = vand.u32 %v1662, 4294901760
      %1664 = vmatmul.mubr.f32.gmra.mrb[0].mxu0 %v1663
      %v1665 = vpop.f32.mrb[0].mxu0
      %v1666 = vadd.f32 0.0, %v1665
      %v1667 = vpop.f32.mrb[0].mxu0
      %1668 = vmatprep.mubr.f32.mxu0 0.0
      %v1669 = vand.u32 %v1516, 4294901760
      %v1670 = vsub.f32 %v1516, %v1669
      %v1671 = vand.u32 %v1670, 4294901760
      %v1672 = vsub.f32 %v1670, %v1671
      %v1673 = vand.u32 %v1672, 4294901760
      %1674 = vmatmul.mubr.f32.gmra.mrb[0].mxu0 %v1673
      %v1675 = vpop.f32.mrb[0].mxu0
      %v1676 = vadd.f32 0.0, %v1675
      %v1677 = vpop.f32.mrb[0].mxu0
      %1678 = vdwg.mxu0
      %1679 = vmatprep.subr.mxu0 0.0
      %v1680 = vand.u32 %v1519, 4294901760
      %v1681 = vsub.f32 %v1519, %v1680
      %v1682 = vand.u32 %v1681, 4294901760
      %v1683 = vsub.f32 %v1681, %v1682
      %v1684 = vand.u32 %v1683, 4294901760
      %1685 = vmatpush1.xpose.msra.mxu0 %v1684
      %1686 = vmatprep.subr.mxu0 0.0
      %v1687 = vand.u32 %v1522, 4294901760
      %v1688 = vsub.f32 %v1522, %v1687
      %v1689 = vand.u32 %v1688, 4294901760
      %v1690 = vsub.f32 %v1688, %v1689
      %v1691 = vand.u32 %v1690, 4294901760
      %1692 = vmatpush1.xpose.msra.mxu0 %v1691
      %1693 = vmatprep.subr.mxu0 0.0
      %v1694 = vand.u32 %v1525, 4294901760
      %v1695 = vsub.f32 %v1525, %v1694
      %v1696 = vand.u32 %v1695, 4294901760
      %v1697 = vsub.f32 %v1695, %v1696
      %v1698 = vand.u32 %v1697, 4294901760
      %1699 = vmatpush1.xpose.msra.mxu0 %v1698
      %1700 = vmatprep.subr.mxu0 0.0
      %v1701 = vand.u32 %v1528, 4294901760
      %v1702 = vsub.f32 %v1528, %v1701
      %v1703 = vand.u32 %v1702, 4294901760
      %v1704 = vsub.f32 %v1702, %v1703
      %v1705 = vand.u32 %v1704, 4294901760
      %1706 = vmatpush1.xpose.msra.mxu0 %v1705
      %1707 = vmatprep.subr.mxu0 0.0
      %1708 = vmatpush1.xpose.msra.mxu0 0.0
      %1709 = vmatprep.subr.mxu0 0.0
      %1710 = vmatpush1.xpose.msra.mxu0 0.0
      %1711 = vmatprep.subr.mxu0 0.0
      %1712 = vmatpush1.xpose.msra.mxu0 0.0
      %1713 = vmatprep.subr.mxu0 0.0
      %1714 = vmatpush1.xpose.msra.mxu0 0.0
      %1715 = vmatprep.subr.mxu0 0.0
      %1716 = vmatpush1.xpose.msra.mxu0 0.0
      %1717 = vmatprep.subr.mxu0 0.0
      %1718 = vmatpush1.xpose.msra.mxu0 0.0
      %1719 = vmatprep.subr.mxu0 0.0
      %1720 = vmatpush1.xpose.msra.mxu0 0.0
      %1721 = vmatprep.subr.mxu0 0.0
      %1722 = vmatpush1.xpose.msra.mxu0 0.0
      %1723 = vmatprep.subr.mxu0 0.0
      %1724 = vmatpush1.xpose.msra.mxu0 0.0
      %1725 = vmatprep.subr.mxu0 0.0
      %1726 = vmatpush1.xpose.msra.mxu0 0.0
      %1727 = vmatprep.subr.mxu0 0.0
      %1728 = vmatpush1.xpose.msra.mxu0 0.0
      %1729 = vmatprep.subr.mxu0 0.0
      %1730 = vmatpush1.xpose.msra.mxu0 0.0
      %1731 = vmatprep.subr.mxu0 0.0
      %1732 = vmatpush1.xpose.msra.mxu0 0.0
      %1733 = vmatprep.subr.mxu0 0.0
      %1734 = vmatpush1.xpose.msra.mxu0 0.0
      %1735 = vmatprep.subr.mxu0 0.0
      %1736 = vmatpush1.xpose.msra.mxu0 0.0
      %1737 = vmatprep.subr.mxu0 0.0
      %1738 = vmatpush1.xpose.msra.mxu0 0.0
      %1739 = vmatprep.subr.mxu0 0.0
      %1740 = vmatpush1.xpose.msra.mxu0 0.0
      %1741 = vmatprep.subr.mxu0 0.0
      %1742 = vmatpush1.xpose.msra.mxu0 0.0
      %1743 = vmatprep.subr.mxu0 0.0
      %1744 = vmatpush1.xpose.msra.mxu0 0.0
      %1745 = vmatprep.subr.mxu0 0.0
      %1746 = vmatpush1.xpose.msra.mxu0 0.0
      %1747 = vmatprep.subr.mxu0 0.0
      %1748 = vmatpush1.xpose.msra.mxu0 0.0
      %1749 = vmatprep.subr.mxu0 0.0
      %1750 = vmatpush1.xpose.msra.mxu0 0.0
      %1751 = vmatprep.subr.mxu0 0.0
      %1752 = vmatpush1.xpose.msra.mxu0 0.0
      %1753 = vmatprep.subr.mxu0 0.0
      %1754 = vmatpush1.xpose.msra.mxu0 0.0
      %1755 = vmatprep.subr.mxu0 0.0
      %1756 = vmatpush1.xpose.msra.mxu0 0.0
      %1757 = vmatprep.subr.mxu0 0.0
      %1758 = vmatpush1.xpose.msra.mxu0 0.0
      %1759 = vmatprep.subr.mxu0 0.0
      %1760 = vmatpush1.xpose.msra.mxu0 0.0
      %1761 = vmatprep.subr.mxu0 0.0
      %1762 = vmatpush1.xpose.msra.mxu0 0.0
      %1763 = vmatprep.mubr.f32.mxu0 0.0
      %v1764 = vand.u32 %v1495, 4294901760
      %1765 = vmatmul.mubr.f32.gmra.mrb[0].mxu0 %v1764
      %v1766 = vpop.f32.mrb[0].mxu0
      %v1767 = vadd.f32 %v1606, %v1766
      %v1768 = vpop.f32.mrb[0].mxu0
      %1769 = vmatprep.mubr.f32.mxu0 0.0
      %v1770 = vand.u32 %v1498, 4294901760
      %1771 = vmatmul.mubr.f32.gmra.mrb[0].mxu0 %v1770
      %v1772 = vpop.f32.mrb[0].mxu0
      %v1773 = vadd.f32 %v1616, %v1772
      %v1774 = vpop.f32.mrb[0].mxu0
      %1775 = vmatprep.mubr.f32.mxu0 0.0
      %v1776 = vand.u32 %v1501, 4294901760
      %1777 = vmatmul.mubr.f32.gmra.mrb[0].mxu0 %v1776
      %v1778 = vpop.f32.mrb[0].mxu0
      %v1779 = vadd.f32 %v1626, %v1778
      %v1780 = vpop.f32.mrb[0].mxu0
      %1781 = vmatprep.mubr.f32.mxu0 0.0
      %v1782 = vand.u32 %v1504, 4294901760
      %1783 = vmatmul.mubr.f32.gmra.mrb[0].mxu0 %v1782
      %v1784 = vpop.f32.mrb[0].mxu0
      %v1785 = vadd.f32 %v1636, %v1784
      %v1786 = vpop.f32.mrb[0].mxu0
      %1787 = vmatprep.mubr.f32.mxu0 0.0
      %v1788 = vand.u32 %v1507, 4294901760
      %1789 = vmatmul.mubr.f32.gmra.mrb[0].mxu0 %v1788
      %v1790 = vpop.f32.mrb[0].mxu0
      %v1791 = vadd.f32 %v1646, %v1790
      %v1792 = vpop.f32.mrb[0].mxu0
      %1793 = vmatprep.mubr.f32.mxu0 0.0
      %v1794 = vand.u32 %v1510, 4294901760
      %1795 = vmatmul.mubr.f32.gmra.mrb[0].mxu0 %v1794
      %v1796 = vpop.f32.mrb[0].mxu0
      %v1797 = vadd.f32 %v1656, %v1796
      %v1798 = vpop.f32.mrb[0].mxu0
      %1799 = vmatprep.mubr.f32.mxu0 0.0
      %v1800 = vand.u32 %v1513, 4294901760
      %1801 = vmatmul.mubr.f32.gmra.mrb[0].mxu0 %v1800
      %v1802 = vpop.f32.mrb[0].mxu0
      %v1803 = vadd.f32 %v1666, %v1802
      %v1804 = vpop.f32.mrb[0].mxu0
      %1805 = vmatprep.mubr.f32.mxu0 0.0
      %v1806 = vand.u32 %v1516, 4294901760
      %1807 = vmatmul.mubr.f32.gmra.mrb[0].mxu0 %v1806
      %v1808 = vpop.f32.mrb[0].mxu0
      %v1809 = vadd.f32 %v1676, %v1808
      %v1810 = vpop.f32.mrb[0].mxu0
      %1811 = vdwg.mxu0
      %1812 = vmatprep.subr.mxu0 0.0
      %v1813 = vand.u32 %v1519, 4294901760
      %v1814 = vsub.f32 %v1519, %v1813
      %1815 = vmatpush1.xpose.msra.mxu0 %v1814
      %1816 = vmatprep.subr.mxu0 0.0
      %v1817 = vand.u32 %v1522, 4294901760
      %v1818 = vsub.f32 %v1522, %v1817
      %1819 = vmatpush1.xpose.msra.mxu0 %v1818
      %1820 = vmatprep.subr.mxu0 0.0
      %v1821 = vand.u32 %v1525, 4294901760
      %v1822 = vsub.f32 %v1525, %v1821
      %1823 = vmatpush1.xpose.msra.mxu0 %v1822
      %1824 = vmatprep.subr.mxu0 0.0
      %v1825 = vand.u32 %v1528, 4294901760
      %v1826 = vsub.f32 %v1528, %v1825
      %1827 = vmatpush1.xpose.msra.mxu0 %v1826
      %1828 = vmatprep.subr.mxu0 0.0
      %1829 = vmatpush1.xpose.msra.mxu0 0.0
      %1830 = vmatprep.subr.mxu0 0.0
      %1831 = vmatpush1.xpose.msra.mxu0 0.0
      %1832 = vmatprep.subr.mxu0 0.0
      %1833 = vmatpush1.xpose.msra.mxu0 0.0
      %1834 = vmatprep.subr.mxu0 0.0
      %1835 = vmatpush1.xpose.msra.mxu0 0.0
      %1836 = vmatprep.subr.mxu0 0.0
      %1837 = vmatpush1.xpose.msra.mxu0 0.0
      %1838 = vmatprep.subr.mxu0 0.0
      %1839 = vmatpush1.xpose.msra.mxu0 0.0
      %1840 = vmatprep.subr.mxu0 0.0
      %1841 = vmatpush1.xpose.msra.mxu0 0.0
      %1842 = vmatprep.subr.mxu0 0.0
      %1843 = vmatpush1.xpose.msra.mxu0 0.0
      %1844 = vmatprep.subr.mxu0 0.0
      %1845 = vmatpush1.xpose.msra.mxu0 0.0
      %1846 = vmatprep.subr.mxu0 0.0
      %1847 = vmatpush1.xpose.msra.mxu0 0.0
      %1848 = vmatprep.subr.mxu0 0.0
      %1849 = vmatpush1.xpose.msra.mxu0 0.0
      %1850 = vmatprep.subr.mxu0 0.0
      %1851 = vmatpush1.xpose.msra.mxu0 0.0
      %1852 = vmatprep.subr.mxu0 0.0
      %1853 = vmatpush1.xpose.msra.mxu0 0.0
      %1854 = vmatprep.subr.mxu0 0.0
      %1855 = vmatpush1.xpose.msra.mxu0 0.0
      %1856 = vmatprep.subr.mxu0 0.0
      %1857 = vmatpush1.xpose.msra.mxu0 0.0
      %1858 = vmatprep.subr.mxu0 0.0
      %1859 = vmatpush1.xpose.msra.mxu0 0.0
      %1860 = vmatprep.subr.mxu0 0.0
      %1861 = vmatpush1.xpose.msra.mxu0 0.0
      %1862 = vmatprep.subr.mxu0 0.0
      %1863 = vmatpush1.xpose.msra.mxu0 0.0
      %1864 = vmatprep.subr.mxu0 0.0
      %1865 = vmatpush1.xpose.msra.mxu0 0.0
      %1866 = vmatprep.subr.mxu0 0.0
      %1867 = vmatpush1.xpose.msra.mxu0 0.0
      %1868 = vmatprep.subr.mxu0 0.0
      %1869 = vmatpush1.xpose.msra.mxu0 0.0
      %1870 = vmatprep.subr.mxu0 0.0
      %1871 = vmatpush1.xpose.msra.mxu0 0.0
      %1872 = vmatprep.subr.mxu0 0.0
      %1873 = vmatpush1.xpose.msra.mxu0 0.0
      %1874 = vmatprep.subr.mxu0 0.0
      %1875 = vmatpush1.xpose.msra.mxu0 0.0
      %1876 = vmatprep.subr.mxu0 0.0
      %1877 = vmatpush1.xpose.msra.mxu0 0.0
      %1878 = vmatprep.subr.mxu0 0.0
      %1879 = vmatpush1.xpose.msra.mxu0 0.0
      %1880 = vmatprep.subr.mxu0 0.0
      %1881 = vmatpush1.xpose.msra.mxu0 0.0
      %1882 = vmatprep.subr.mxu0 0.0
      %1883 = vmatpush1.xpose.msra.mxu0 0.0
      %1884 = vmatprep.mubr.f32.mxu0 0.0
      %v1885 = vand.u32 %v1495, 4294901760
      %v1886 = vsub.f32 %v1495, %v1885
      %1887 = vmatmul.mubr.f32.gmra.mrb[0].mxu0 %v1886
      %v1888 = vpop.f32.mrb[0].mxu0
      %v1889 = vadd.f32 %v1767, %v1888
      %v1890 = vpop.f32.mrb[0].mxu0
      %1891 = vmatprep.mubr.f32.mxu0 0.0
      %v1892 = vand.u32 %v1498, 4294901760
      %v1893 = vsub.f32 %v1498, %v1892
      %1894 = vmatmul.mubr.f32.gmra.mrb[0].mxu0 %v1893
      %v1895 = vpop.f32.mrb[0].mxu0
      %v1896 = vadd.f32 %v1773, %v1895
      %v1897 = vpop.f32.mrb[0].mxu0
      %1898 = vmatprep.mubr.f32.mxu0 0.0
      %v1899 = vand.u32 %v1501, 4294901760
      %v1900 = vsub.f32 %v1501, %v1899
      %1901 = vmatmul.mubr.f32.gmra.mrb[0].mxu0 %v1900
      %v1902 = vpop.f32.mrb[0].mxu0
      %v1903 = vadd.f32 %v1779, %v1902
      %v1904 = vpop.f32.mrb[0].mxu0
      %1905 = vmatprep.mubr.f32.mxu0 0.0
      %v1906 = vand.u32 %v1504, 4294901760
      %v1907 = vsub.f32 %v1504, %v1906
      %1908 = vmatmul.mubr.f32.gmra.mrb[0].mxu0 %v1907
      %v1909 = vpop.f32.mrb[0].mxu0
      %v1910 = vadd.f32 %v1785, %v1909
      %v1911 = vpop.f32.mrb[0].mxu0
      %1912 = vmatprep.mubr.f32.mxu0 0.0
      %v1913 = vand.u32 %v1507, 4294901760
      %v1914 = vsub.f32 %v1507, %v1913
      %1915 = vmatmul.mubr.f32.gmra.mrb[0].mxu0 %v1914
      %v1916 = vpop.f32.mrb[0].mxu0
      %v1917 = vadd.f32 %v1791, %v1916
      %v1918 = vpop.f32.mrb[0].mxu0
      %1919 = vmatprep.mubr.f32.mxu0 0.0
      %v1920 = vand.u32 %v1510, 4294901760
      %v1921 = vsub.f32 %v1510, %v1920
      %1922 = vmatmul.mubr.f32.gmra.mrb[0].mxu0 %v1921
      %v1923 = vpop.f32.mrb[0].mxu0
      %v1924 = vadd.f32 %v1797, %v1923
      %v1925 = vpop.f32.mrb[0].mxu0
      %1926 = vmatprep.mubr.f32.mxu0 0.0
      %v1927 = vand.u32 %v1513, 4294901760
      %v1928 = vsub.f32 %v1513, %v1927
      %1929 = vmatmul.mubr.f32.gmra.mrb[0].mxu0 %v1928
      %v1930 = vpop.f32.mrb[0].mxu0
      %v1931 = vadd.f32 %v1803, %v1930
      %v1932 = vpop.f32.mrb[0].mxu0
      %1933 = vmatprep.mubr.f32.mxu0 0.0
      %v1934 = vand.u32 %v1516, 4294901760
      %v1935 = vsub.f32 %v1516, %v1934
      %1936 = vmatmul.mubr.f32.gmra.mrb[0].mxu0 %v1935
      %v1937 = vpop.f32.mrb[0].mxu0
      %v1938 = vadd.f32 %v1809, %v1937
      %v1939 = vpop.f32.mrb[0].mxu0
      %1940 = vdwg.mxu0
      %1941 = vmatprep.subr.mxu0 0.0
      %v1942 = vand.u32 %v1519, 4294901760
      %1943 = vmatpush1.xpose.msra.mxu0 %v1942
      %1944 = vmatprep.subr.mxu0 0.0
      %v1945 = vand.u32 %v1522, 4294901760
      %1946 = vmatpush1.xpose.msra.mxu0 %v1945
      %1947 = vmatprep.subr.mxu0 0.0
      %v1948 = vand.u32 %v1525, 4294901760
      %1949 = vmatpush1.xpose.msra.mxu0 %v1948
      %1950 = vmatprep.subr.mxu0 0.0
      %v1951 = vand.u32 %v1528, 4294901760
      %1952 = vmatpush1.xpose.msra.mxu0 %v1951
      %1953 = vmatprep.subr.mxu0 0.0
      %1954 = vmatpush1.xpose.msra.mxu0 0.0
      %1955 = vmatprep.subr.mxu0 0.0
      %1956 = vmatpush1.xpose.msra.mxu0 0.0
      %1957 = vmatprep.subr.mxu0 0.0
      %1958 = vmatpush1.xpose.msra.mxu0 0.0
      %1959 = vmatprep.subr.mxu0 0.0
      %1960 = vmatpush1.xpose.msra.mxu0 0.0
      %1961 = vmatprep.subr.mxu0 0.0
      %1962 = vmatpush1.xpose.msra.mxu0 0.0
      %1963 = vmatprep.subr.mxu0 0.0
      %1964 = vmatpush1.xpose.msra.mxu0 0.0
      %1965 = vmatprep.subr.mxu0 0.0
      %1966 = vmatpush1.xpose.msra.mxu0 0.0
      %1967 = vmatprep.subr.mxu0 0.0
      %1968 = vmatpush1.xpose.msra.mxu0 0.0
      %1969 = vmatprep.subr.mxu0 0.0
      %1970 = vmatpush1.xpose.msra.mxu0 0.0
      %1971 = vmatprep.subr.mxu0 0.0
      %1972 = vmatpush1.xpose.msra.mxu0 0.0
      %1973 = vmatprep.subr.mxu0 0.0
      %1974 = vmatpush1.xpose.msra.mxu0 0.0
      %1975 = vmatprep.subr.mxu0 0.0
      %1976 = vmatpush1.xpose.msra.mxu0 0.0
      %1977 = vmatprep.subr.mxu0 0.0
      %1978 = vmatpush1.xpose.msra.mxu0 0.0
      %1979 = vmatprep.subr.mxu0 0.0
      %1980 = vmatpush1.xpose.msra.mxu0 0.0
      %1981 = vmatprep.subr.mxu0 0.0
      %1982 = vmatpush1.xpose.msra.mxu0 0.0
      %1983 = vmatprep.subr.mxu0 0.0
      %1984 = vmatpush1.xpose.msra.mxu0 0.0
      %1985 = vmatprep.subr.mxu0 0.0
      %1986 = vmatpush1.xpose.msra.mxu0 0.0
      %1987 = vmatprep.subr.mxu0 0.0
      %1988 = vmatpush1.xpose.msra.mxu0 0.0
      %1989 = vmatprep.subr.mxu0 0.0
      %1990 = vmatpush1.xpose.msra.mxu0 0.0
      %1991 = vmatprep.subr.mxu0 0.0
      %1992 = vmatpush1.xpose.msra.mxu0 0.0
      %1993 = vmatprep.subr.mxu0 0.0
      %1994 = vmatpush1.xpose.msra.mxu0 0.0
      %1995 = vmatprep.subr.mxu0 0.0
      %1996 = vmatpush1.xpose.msra.mxu0 0.0
      %1997 = vmatprep.subr.mxu0 0.0
      %1998 = vmatpush1.xpose.msra.mxu0 0.0
      %1999 = vmatprep.subr.mxu0 0.0
      %2000 = vmatpush1.xpose.msra.mxu0 0.0
      %2001 = vmatprep.subr.mxu0 0.0
      %2002 = vmatpush1.xpose.msra.mxu0 0.0
      %2003 = vmatprep.subr.mxu0 0.0
      %2004 = vmatpush1.xpose.msra.mxu0 0.0
      %2005 = vmatprep.subr.mxu0 0.0
      %2006 = vmatpush1.xpose.msra.mxu0 0.0
      %2007 = vmatprep.subr.mxu0 0.0
      %2008 = vmatpush1.xpose.msra.mxu0 0.0
      %2009 = vmatprep.mubr.f32.mxu0 0.0
      %v2010 = vand.u32 %v1495, 4294901760
      %v2011 = vsub.f32 %v1495, %v2010
      %v2012 = vand.u32 %v2011, 4294901760
      %2013 = vmatmul.mubr.f32.gmra.mrb[0].mxu0 %v2012
      %v2014 = vpop.f32.mrb[0].mxu0
      %v2015 = vadd.f32 %v1889, %v2014
      %v2016 = vpop.f32.mrb[0].mxu0
      %2017 = vmatprep.mubr.f32.mxu0 0.0
      %v2018 = vand.u32 %v1498, 4294901760
      %v2019 = vsub.f32 %v1498, %v2018
      %v2020 = vand.u32 %v2019, 4294901760
      %2021 = vmatmul.mubr.f32.gmra.mrb[0].mxu0 %v2020
      %v2022 = vpop.f32.mrb[0].mxu0
      %v2023 = vadd.f32 %v1896, %v2022
      %v2024 = vpop.f32.mrb[0].mxu0
      %2025 = vmatprep.mubr.f32.mxu0 0.0
      %v2026 = vand.u32 %v1501, 4294901760
      %v2027 = vsub.f32 %v1501, %v2026
      %v2028 = vand.u32 %v2027, 4294901760
      %2029 = vmatmul.mubr.f32.gmra.mrb[0].mxu0 %v2028
      %v2030 = vpop.f32.mrb[0].mxu0
      %v2031 = vadd.f32 %v1903, %v2030
      %v2032 = vpop.f32.mrb[0].mxu0
      %2033 = vmatprep.mubr.f32.mxu0 0.0
      %v2034 = vand.u32 %v1504, 4294901760
      %v2035 = vsub.f32 %v1504, %v2034
      %v2036 = vand.u32 %v2035, 4294901760
      %2037 = vmatmul.mubr.f32.gmra.mrb[0].mxu0 %v2036
      %v2038 = vpop.f32.mrb[0].mxu0
      %v2039 = vadd.f32 %v1910, %v2038
      %v2040 = vpop.f32.mrb[0].mxu0
      %2041 = vmatprep.mubr.f32.mxu0 0.0
      %v2042 = vand.u32 %v1507, 4294901760
      %v2043 = vsub.f32 %v1507, %v2042
      %v2044 = vand.u32 %v2043, 4294901760
      %2045 = vmatmul.mubr.f32.gmra.mrb[0].mxu0 %v2044
      %v2046 = vpop.f32.mrb[0].mxu0
      %v2047 = vadd.f32 %v1917, %v2046
      %v2048 = vpop.f32.mrb[0].mxu0
      %2049 = vmatprep.mubr.f32.mxu0 0.0
      %v2050 = vand.u32 %v1510, 4294901760
      %v2051 = vsub.f32 %v1510, %v2050
      %v2052 = vand.u32 %v2051, 4294901760
      %2053 = vmatmul.mubr.f32.gmra.mrb[0].mxu0 %v2052
      %v2054 = vpop.f32.mrb[0].mxu0
      %v2055 = vadd.f32 %v1924, %v2054
      %v2056 = vpop.f32.mrb[0].mxu0
      %2057 = vmatprep.mubr.f32.mxu0 0.0
      %v2058 = vand.u32 %v1513, 4294901760
      %v2059 = vsub.f32 %v1513, %v2058
      %v2060 = vand.u32 %v2059, 4294901760
      %2061 = vmatmul.mubr.f32.gmra.mrb[0].mxu0 %v2060
      %v2062 = vpop.f32.mrb[0].mxu0
      %v2063 = vadd.f32 %v1931, %v2062
      %v2064 = vpop.f32.mrb[0].mxu0
      %2065 = vmatprep.mubr.f32.mxu0 0.0
      %v2066 = vand.u32 %v1516, 4294901760
      %v2067 = vsub.f32 %v1516, %v2066
      %v2068 = vand.u32 %v2067, 4294901760
      %2069 = vmatmul.mubr.f32.gmra.mrb[0].mxu0 %v2068
      %v2070 = vpop.f32.mrb[0].mxu0
      %v2071 = vadd.f32 %v1938, %v2070
      %v2072 = vpop.f32.mrb[0].mxu0
      %2073 = vdwg.mxu0
      %2074 = vmatprep.subr.mxu0 0.0
      %v2075 = vand.u32 %v1519, 4294901760
      %v2076 = vsub.f32 %v1519, %v2075
      %v2077 = vand.u32 %v2076, 4294901760
      %2078 = vmatpush1.xpose.msra.mxu0 %v2077
      %2079 = vmatprep.subr.mxu0 0.0
      %v2080 = vand.u32 %v1522, 4294901760
      %v2081 = vsub.f32 %v1522, %v2080
      %v2082 = vand.u32 %v2081, 4294901760
      %2083 = vmatpush1.xpose.msra.mxu0 %v2082
      %2084 = vmatprep.subr.mxu0 0.0
      %v2085 = vand.u32 %v1525, 4294901760
      %v2086 = vsub.f32 %v1525, %v2085
      %v2087 = vand.u32 %v2086, 4294901760
      %2088 = vmatpush1.xpose.msra.mxu0 %v2087
      %2089 = vmatprep.subr.mxu0 0.0
      %v2090 = vand.u32 %v1528, 4294901760
      %v2091 = vsub.f32 %v1528, %v2090
      %v2092 = vand.u32 %v2091, 4294901760
      %2093 = vmatpush1.xpose.msra.mxu0 %v2092
      %2094 = vmatprep.subr.mxu0 0.0
      %2095 = vmatpush1.xpose.msra.mxu0 0.0
      %2096 = vmatprep.subr.mxu0 0.0
      %2097 = vmatpush1.xpose.msra.mxu0 0.0
      %2098 = vmatprep.subr.mxu0 0.0
      %2099 = vmatpush1.xpose.msra.mxu0 0.0
      %2100 = vmatprep.subr.mxu0 0.0
      %2101 = vmatpush1.xpose.msra.mxu0 0.0
      %2102 = vmatprep.subr.mxu0 0.0
      %2103 = vmatpush1.xpose.msra.mxu0 0.0
      %2104 = vmatprep.subr.mxu0 0.0
      %2105 = vmatpush1.xpose.msra.mxu0 0.0
      %2106 = vmatprep.subr.mxu0 0.0
      %2107 = vmatpush1.xpose.msra.mxu0 0.0
      %2108 = vmatprep.subr.mxu0 0.0
      %2109 = vmatpush1.xpose.msra.mxu0 0.0
      %2110 = vmatprep.subr.mxu0 0.0
      %2111 = vmatpush1.xpose.msra.mxu0 0.0
      %2112 = vmatprep.subr.mxu0 0.0
      %2113 = vmatpush1.xpose.msra.mxu0 0.0
      %2114 = vmatprep.subr.mxu0 0.0
      %2115 = vmatpush1.xpose.msra.mxu0 0.0
      %2116 = vmatprep.subr.mxu0 0.0
      %2117 = vmatpush1.xpose.msra.mxu0 0.0
      %2118 = vmatprep.subr.mxu0 0.0
      %2119 = vmatpush1.xpose.msra.mxu0 0.0
      %2120 = vmatprep.subr.mxu0 0.0
      %2121 = vmatpush1.xpose.msra.mxu0 0.0
      %2122 = vmatprep.subr.mxu0 0.0
      %2123 = vmatpush1.xpose.msra.mxu0 0.0
      %2124 = vmatprep.subr.mxu0 0.0
      %2125 = vmatpush1.xpose.msra.mxu0 0.0
      %2126 = vmatprep.subr.mxu0 0.0
      %2127 = vmatpush1.xpose.msra.mxu0 0.0
      %2128 = vmatprep.subr.mxu0 0.0
      %2129 = vmatpush1.xpose.msra.mxu0 0.0
      %2130 = vmatprep.subr.mxu0 0.0
      %2131 = vmatpush1.xpose.msra.mxu0 0.0
      %2132 = vmatprep.subr.mxu0 0.0
      %2133 = vmatpush1.xpose.msra.mxu0 0.0
      %2134 = vmatprep.subr.mxu0 0.0
      %2135 = vmatpush1.xpose.msra.mxu0 0.0
      %2136 = vmatprep.subr.mxu0 0.0
      %2137 = vmatpush1.xpose.msra.mxu0 0.0
      %2138 = vmatprep.subr.mxu0 0.0
      %2139 = vmatpush1.xpose.msra.mxu0 0.0
      %2140 = vmatprep.subr.mxu0 0.0
      %2141 = vmatpush1.xpose.msra.mxu0 0.0
      %2142 = vmatprep.subr.mxu0 0.0
      %2143 = vmatpush1.xpose.msra.mxu0 0.0
      %2144 = vmatprep.subr.mxu0 0.0
      %2145 = vmatpush1.xpose.msra.mxu0 0.0
      %2146 = vmatprep.subr.mxu0 0.0
      %2147 = vmatpush1.xpose.msra.mxu0 0.0
      %2148 = vmatprep.subr.mxu0 0.0
      %2149 = vmatpush1.xpose.msra.mxu0 0.0
      %2150 = vmatprep.mubr.f32.mxu0 0.0
      %v2151 = vand.u32 %v1495, 4294901760
      %2152 = vmatmul.mubr.f32.gmra.mrb[0].mxu0 %v2151
      %v2153 = vpop.f32.mrb[0].mxu0
      %v2154 = vadd.f32 %v2015, %v2153
      %v2155 = vpop.f32.mrb[0].mxu0
      %2156 = vmatprep.mubr.f32.mxu0 0.0
      %v2157 = vand.u32 %v1498, 4294901760
      %2158 = vmatmul.mubr.f32.gmra.mrb[0].mxu0 %v2157
      %v2159 = vpop.f32.mrb[0].mxu0
      %v2160 = vadd.f32 %v2023, %v2159
      %v2161 = vpop.f32.mrb[0].mxu0
      %2162 = vmatprep.mubr.f32.mxu0 0.0
      %v2163 = vand.u32 %v1501, 4294901760
      %2164 = vmatmul.mubr.f32.gmra.mrb[0].mxu0 %v2163
      %v2165 = vpop.f32.mrb[0].mxu0
      %v2166 = vadd.f32 %v2031, %v2165
      %v2167 = vpop.f32.mrb[0].mxu0
      %2168 = vmatprep.mubr.f32.mxu0 0.0
      %v2169 = vand.u32 %v1504, 4294901760
      %2170 = vmatmul.mubr.f32.gmra.mrb[0].mxu0 %v2169
      %v2171 = vpop.f32.mrb[0].mxu0
      %v2172 = vadd.f32 %v2039, %v2171
      %v2173 = vpop.f32.mrb[0].mxu0
      %2174 = vmatprep.mubr.f32.mxu0 0.0
      %v2175 = vand.u32 %v1507, 4294901760
      %2176 = vmatmul.mubr.f32.gmra.mrb[0].mxu0 %v2175
      %v2177 = vpop.f32.mrb[0].mxu0
      %v2178 = vadd.f32 %v2047, %v2177
      %v2179 = vpop.f32.mrb[0].mxu0
      %2180 = vmatprep.mubr.f32.mxu0 0.0
      %v2181 = vand.u32 %v1510, 4294901760
      %2182 = vmatmul.mubr.f32.gmra.mrb[0].mxu0 %v2181
      %v2183 = vpop.f32.mrb[0].mxu0
      %v2184 = vadd.f32 %v2055, %v2183
      %v2185 = vpop.f32.mrb[0].mxu0
      %2186 = vmatprep.mubr.f32.mxu0 0.0
      %v2187 = vand.u32 %v1513, 4294901760
      %2188 = vmatmul.mubr.f32.gmra.mrb[0].mxu0 %v2187
      %v2189 = vpop.f32.mrb[0].mxu0
      %v2190 = vadd.f32 %v2063, %v2189
      %v2191 = vpop.f32.mrb[0].mxu0
      %2192 = vmatprep.mubr.f32.mxu0 0.0
      %v2193 = vand.u32 %v1516, 4294901760
      %2194 = vmatmul.mubr.f32.gmra.mrb[0].mxu0 %v2193
      %v2195 = vpop.f32.mrb[0].mxu0
      %v2196 = vadd.f32 %v2071, %v2195
      %v2197 = vpop.f32.mrb[0].mxu0
      %2198 = vdwg.mxu0
      %2199 = vmatprep.subr.mxu0 0.0
      %v2200 = vand.u32 %v1519, 4294901760
      %2201 = vmatpush1.xpose.msra.mxu0 %v2200
      %2202 = vmatprep.subr.mxu0 0.0
      %v2203 = vand.u32 %v1522, 4294901760
      %2204 = vmatpush1.xpose.msra.mxu0 %v2203
      %2205 = vmatprep.subr.mxu0 0.0
      %v2206 = vand.u32 %v1525, 4294901760
      %2207 = vmatpush1.xpose.msra.mxu0 %v2206
      %2208 = vmatprep.subr.mxu0 0.0
      %v2209 = vand.u32 %v1528, 4294901760
      %2210 = vmatpush1.xpose.msra.mxu0 %v2209
      %2211 = vmatprep.subr.mxu0 0.0
      %2212 = vmatpush1.xpose.msra.mxu0 0.0
      %2213 = vmatprep.subr.mxu0 0.0
      %2214 = vmatpush1.xpose.msra.mxu0 0.0
      %2215 = vmatprep.subr.mxu0 0.0
      %2216 = vmatpush1.xpose.msra.mxu0 0.0
      %2217 = vmatprep.subr.mxu0 0.0
      %2218 = vmatpush1.xpose.msra.mxu0 0.0
      %2219 = vmatprep.subr.mxu0 0.0
      %2220 = vmatpush1.xpose.msra.mxu0 0.0
      %2221 = vmatprep.subr.mxu0 0.0
      %2222 = vmatpush1.xpose.msra.mxu0 0.0
      %2223 = vmatprep.subr.mxu0 0.0
      %2224 = vmatpush1.xpose.msra.mxu0 0.0
      %2225 = vmatprep.subr.mxu0 0.0
      %2226 = vmatpush1.xpose.msra.mxu0 0.0
      %2227 = vmatprep.subr.mxu0 0.0
      %2228 = vmatpush1.xpose.msra.mxu0 0.0
      %2229 = vmatprep.subr.mxu0 0.0
      %2230 = vmatpush1.xpose.msra.mxu0 0.0
      %2231 = vmatprep.subr.mxu0 0.0
      %2232 = vmatpush1.xpose.msra.mxu0 0.0
      %2233 = vmatprep.subr.mxu0 0.0
      %2234 = vmatpush1.xpose.msra.mxu0 0.0
      %2235 = vmatprep.subr.mxu0 0.0
      %2236 = vmatpush1.xpose.msra.mxu0 0.0
      %2237 = vmatprep.subr.mxu0 0.0
      %2238 = vmatpush1.xpose.msra.mxu0 0.0
      %2239 = vmatprep.subr.mxu0 0.0
      %2240 = vmatpush1.xpose.msra.mxu0 0.0
      %2241 = vmatprep.subr.mxu0 0.0
      %2242 = vmatpush1.xpose.msra.mxu0 0.0
      %2243 = vmatprep.subr.mxu0 0.0
      %2244 = vmatpush1.xpose.msra.mxu0 0.0
      %2245 = vmatprep.subr.mxu0 0.0
      %2246 = vmatpush1.xpose.msra.mxu0 0.0
      %2247 = vmatprep.subr.mxu0 0.0
      %2248 = vmatpush1.xpose.msra.mxu0 0.0
      %2249 = vmatprep.subr.mxu0 0.0
      %2250 = vmatpush1.xpose.msra.mxu0 0.0
      %2251 = vmatprep.subr.mxu0 0.0
      %2252 = vmatpush1.xpose.msra.mxu0 0.0
      %2253 = vmatprep.subr.mxu0 0.0
      %2254 = vmatpush1.xpose.msra.mxu0 0.0
      %2255 = vmatprep.subr.mxu0 0.0
      %2256 = vmatpush1.xpose.msra.mxu0 0.0
      %2257 = vmatprep.subr.mxu0 0.0
      %2258 = vmatpush1.xpose.msra.mxu0 0.0
      %2259 = vmatprep.subr.mxu0 0.0
      %2260 = vmatpush1.xpose.msra.mxu0 0.0
      %2261 = vmatprep.subr.mxu0 0.0
      %2262 = vmatpush1.xpose.msra.mxu0 0.0
      %2263 = vmatprep.subr.mxu0 0.0
      %2264 = vmatpush1.xpose.msra.mxu0 0.0
      %2265 = vmatprep.subr.mxu0 0.0
      %2266 = vmatpush1.xpose.msra.mxu0 0.0
      %2267 = vmatprep.mubr.f32.mxu0 0.0
      %v2268 = vand.u32 %v1495, 4294901760
      %2269 = vmatmul.mubr.f32.gmra.mrb[0].mxu0 %v2268
      %v2270 = vpop.f32.mrb[0].mxu0
      %v2271 = vadd.f32 %v2154, %v2270
      %v2272 = vpop.f32.mrb[0].mxu0
      %2273 = vmatprep.mubr.f32.mxu0 0.0
      %v2274 = vand.u32 %v1498, 4294901760
      %2275 = vmatmul.mubr.f32.gmra.mrb[0].mxu0 %v2274
      %v2276 = vpop.f32.mrb[0].mxu0
      %v2277 = vadd.f32 %v2160, %v2276
      %v2278 = vpop.f32.mrb[0].mxu0
      %2279 = vmatprep.mubr.f32.mxu0 0.0
      %v2280 = vand.u32 %v1501, 4294901760
      %2281 = vmatmul.mubr.f32.gmra.mrb[0].mxu0 %v2280
      %v2282 = vpop.f32.mrb[0].mxu0
      %v2283 = vadd.f32 %v2166, %v2282
      %v2284 = vpop.f32.mrb[0].mxu0
      %2285 = vmatprep.mubr.f32.mxu0 0.0
      %v2286 = vand.u32 %v1504, 4294901760
      %2287 = vmatmul.mubr.f32.gmra.mrb[0].mxu0 %v2286
      %v2288 = vpop.f32.mrb[0].mxu0
      %v2289 = vadd.f32 %v2172, %v2288
      %v2290 = vpop.f32.mrb[0].mxu0
      %2291 = vmatprep.mubr.f32.mxu0 0.0
      %v2292 = vand.u32 %v1507, 4294901760
      %2293 = vmatmul.mubr.f32.gmra.mrb[0].mxu0 %v2292
      %v2294 = vpop.f32.mrb[0].mxu0
      %v2295 = vadd.f32 %v2178, %v2294
      %v2296 = vpop.f32.mrb[0].mxu0
      %2297 = vmatprep.mubr.f32.mxu0 0.0
      %v2298 = vand.u32 %v1510, 4294901760
      %2299 = vmatmul.mubr.f32.gmra.mrb[0].mxu0 %v2298
      %v2300 = vpop.f32.mrb[0].mxu0
      %v2301 = vadd.f32 %v2184, %v2300
      %v2302 = vpop.f32.mrb[0].mxu0
      %2303 = vmatprep.mubr.f32.mxu0 0.0
      %v2304 = vand.u32 %v1513, 4294901760
      %2305 = vmatmul.mubr.f32.gmra.mrb[0].mxu0 %v2304
      %v2306 = vpop.f32.mrb[0].mxu0
      %v2307 = vadd.f32 %v2190, %v2306
      %v2308 = vpop.f32.mrb[0].mxu0
      %2309 = vmatprep.mubr.f32.mxu0 0.0
      %v2310 = vand.u32 %v1516, 4294901760
      %2311 = vmatmul.mubr.f32.gmra.mrb[0].mxu0 %v2310
      %v2312 = vpop.f32.mrb[0].mxu0
      %v2313 = vadd.f32 %v2196, %v2312
      %v2314 = vpop.f32.mrb[0].mxu0
      %2315 = vdwg.mxu0
      %v2316 = vrcp.pop %v1472
      %v2317 = vmul.f32 1.0, %v2316
      %v2318 = vrcp.pop %v1475
      %v2319 = vmul.f32 1.0, %v2318
      %v2320 = vrcp.pop %v1478
      %v2321 = vmul.f32 1.0, %v2320
      %v2322 = vrcp.pop %v1481
      %v2323 = vmul.f32 1.0, %v2322
      %v2324 = vrcp.pop %v1484
      %v2325 = vmul.f32 1.0, %v2324
      %v2326 = vrcp.pop %v1487
      %v2327 = vmul.f32 1.0, %v2326
      %v2328 = vrcp.pop %v1490
      %v2329 = vmul.f32 1.0, %v2328
      %v2330 = vrcp.pop %v1493
      %v2331 = vmul.f32 1.0, %v2330
      %v2332 = vmul.f32 %v2271, %v2317
      %v2333 = vmul.f32 %v2277, %v2319
      %v2334 = vmul.f32 %v2283, %v2321
      %v2335 = vmul.f32 %v2289, %v2323
      %v2336 = vmul.f32 %v2295, %v2325
      %v2337 = vmul.f32 %v2301, %v2327
      %v2338 = vmul.f32 %v2307, %v2329
      %v2339 = vmul.f32 %v2313, %v2331
      %2340 = vst.msk [vmem:[%s248] sm:$0xff] %vm274, %v2332
      %2341 = vst.msk [vmem:[%s248 + $0x8] sm:$0xff] %vm274, %v2333
      %2342 = vst.msk [vmem:[%s248 + $0x10] sm:$0xff] %vm274, %v2334
      %2343 = vst.msk [vmem:[%s248 + $0x18] sm:$0xff] %vm274, %v2335
      %2344 = vst.msk [vmem:[%s248 + $0x20] sm:$0xff] %vm274, %v2336
      %2345 = vst.msk [vmem:[%s248 + $0x28] sm:$0xff] %vm274, %v2337
      %2346 = vst.msk [vmem:[%s248 + $0x30] sm:$0xff] %vm274, %v2338
      %2347 = vst.msk [vmem:[%s248 + $0x38] sm:$0xff] %vm274, %v2339
      %s2348 = smul.u32 8, %s19
      %p2349 = scmp.lt.s32.totalorder %s18, 1
      %s2350 = scalar_select %p2349, %s18, 1
      %p2351 = scmp.lt.s32.totalorder %s2348, 7
      %s2352 = scalar_select %p2351, %s2348, 7
      %s2353 = smul.addr %s2350, 8
      %s2354 = sadd.s32 %s2352, %s2353
      %s2355 = smul.addr %s2354, 8
      %s2356 = scalar_lea.vmem %s3, %s2355
      // Predicated region
      $region33: #{tpu_custom_call.1} parent=31 // pred_check
        %p2357 = pneg %p126
      $region34: #{tpu_custom_call.1} parent=31 // pred_check_branch
        %2359 = sbr.rel (%p2357) target = $region36
      $region35: #{tpu_custom_call.1} parent=31 // pred_region
        %s2360 = smul.u32 8, %s19
      $region36: #{tpu_custom_call.1} parent=31 // pred_fallthru
        _
    $region32: #{tpu_custom_call.1} parent=5 // pred_fallthru
      _
    %p2361 = scmp.le.s32.totalorder 2, %s9
    // Predicated region
    $region37: #{tpu_custom_call.1} parent=5 // pred_check
      %p2362 = pneg %p2361
    $region38: #{tpu_custom_call.1} parent=5 // pred_check_branch
      %2364 = sbr.rel (%p2362) target = $region40
    $region39: #{tpu_custom_call.1} parent=5 // pred_region
      %s2365 = ssub.s32 %s9, 2
      // Predicated region
      $region41: #{tpu_custom_call.1} parent=39 // pred_check
        %p2366 = pneg %p132
      $region42: #{tpu_custom_call.1} parent=39 // pred_check_branch
        %2368 = sbr.rel (%p2366) target = $region44
      $region43: #{tpu_custom_call.1} parent=39 // pred_region
        %s2369 = smul.u32 8, %s21
        %p2370 = scmp.lt.s32.totalorder %s20, 1
        %s2371 = scalar_select %p2370, %s20, 1
        %p2372 = scmp.lt.s32.totalorder %s2369, 7
        %s2373 = scalar_select %p2372, %s2369, 7
        %s2374 = smul.addr %s2371, 8
        %s2375 = sadd.s32 %s2373, %s2374
        %s2376 = smul.addr %s2375, 8
        %s2377 = scalar_lea.vmem %s3, %s2376
      $region44: #{tpu_custom_call.1} parent=39 // pred_fallthru
        _
    $region40: #{tpu_custom_call.1} parent=5 // pred_fallthru
      _
  $region6: #{tpu_custom_call.1} parent=0 // loop_footer
    %s13 = sadd.s32 1, %s9
  $region7: #{tpu_custom_call.1} parent=0 // loop_footer_branch
    %8 = sbr.rel target = $region3
  $region8: #{tpu_custom_call.1} parent=0 // loop_exit
    _

</llo_original>
